<compile_context>
chip_gen: v7x
topology: tpu7x:2x2x1
jax: 0.10.0
libtpu: 0.0.40
codegen_flags: <defaults>
</compile_context>

<pallas_src>
import functools

import jax
import jax.numpy as jnp
import numpy as np
from jax.experimental import pallas as pl
from jax.experimental.pallas import tpu as pltpu

# ----------------------------- model config ---------------------------------
CAT_VOCAB = 10
CAT_EMB = 8
FIXED_VOCAB = 7
FIXED_EMB = 6
TS_FEAT = 1          # src_ts / trg_ts feature dim
XDAYS_FEAT = 1       # src_xdaysago / trg_xdaysago feature dim
IN_CH = TS_FEAT + XDAYS_FEAT + CAT_EMB + FIXED_EMB   # 16

RES_CH = 32
SKIP_CH = 32
OUT_CH = 1
DILATIONS = (1, 2, 4)
NUM_LAYERS = len(DILATIONS)

ENC_LEN = 12
DEC_LEN = 5
BATCH = 2

LANES = 128          # weight-slab / output lane width
OUT_PAD = LANES      # lane-dense output width (real channel is column 0)


# -------------------------- weight-slab layout -------------------------------
def _build_layout():
    """Static row offsets (8-aligned) of every packed weight inside the slab."""
    off = {}
    row = 0

    def add(name, nrows):
        nonlocal row
        off[name] = row
        row += -(-nrows // 8) * 8          # pad each piece to a sublane multiple

    add("w_in", IN_CH)                     # (IN_CH, RES_CH)
    add("b_in", 1)                         # (1, RES_CH)
    for l in range(NUM_LAYERS):
        add(f"wfg{l}", 2 * RES_CH)         # (64, 64)  [[wf1 wg1],[wf0 wg0]]
        add(f"bfg{l}", 1)                  # (1, 64)   [bf | bg]
        add(f"wsr{l}", RES_CH)             # (32, 64)  [ws | wr]
        add(f"bsr{l}", 1)                  # (1, 64)   [bs | br]
    add("wo1", SKIP_CH)                    # (32, 32)
    add("bo1", 1)                          # (1, 32)
    add("wo2", SKIP_CH)                    # (32, 128) zero-padded
    add("bo2", 1)                          # (1, 128)  zero-padded
    return off, row


OFF, SLAB_ROWS = _build_layout()           # SLAB_ROWS = 440 (multiple of 8)


def pack_wavenet_slab(p):
    """Pack all WaveNet weights/biases into one (SLAB_ROWS, 128) f32 slab."""
    slab = np.zeros((SLAB_ROWS, LANES), np.float32)

    def put(name, arr):
        arr = np.asarray(arr, np.float32)
        r, c = arr.shape
        slab[OFF[name]:OFF[name] + r, :c] = arr

    put("w_in", p["w_in"])
    put("b_in", p["b_in"])
    for l in range(NUM_LAYERS):
        w_fg = np.block([[np.asarray(p["wf1"][l]), np.asarray(p["wg1"][l])],
                         [np.asarray(p["wf0"][l]), np.asarray(p["wg0"][l])]])
        b_fg = np.concatenate([np.asarray(p["bf"][l]), np.asarray(p["bg"][l])], axis=1)
        w_sr = np.concatenate([np.asarray(p["ws"][l]), np.asarray(p["wr"][l])], axis=1)
        b_sr = np.concatenate([np.asarray(p["bs"][l]), np.asarray(p["br"][l])], axis=1)
        put(f"wfg{l}", w_fg)
        put(f"bfg{l}", b_fg)
        put(f"wsr{l}", w_sr)
        put(f"bsr{l}", b_sr)
    put("wo1", p["wo1"])
    put("bo1", p["bo1"])
    put("wo2", p["wo2"])                   # (32, 1) -> zero-padded to 128 lanes
    put("bo2", p["bo2"])                   # (1, 1)  -> zero-padded to 128 lanes
    return jnp.asarray(slab)


# ----------------------------- Pallas kernel --------------------------------
def wavenet_kernel(x_ref, w_ref, out_ref, *, batch):
    # x_ref: (T*B, IN_CH) time-major flat rows (row i -> time i//B, batch i%B)
    x = x_ref[...]
    tb = x.shape[0]

    w_in = w_ref[OFF["w_in"]:OFF["w_in"] + IN_CH, :RES_CH]
    b_in = w_ref[OFF["b_in"]:OFF["b_in"] + 1, :RES_CH]
    h = jnp.dot(x, w_in, preferred_element_type=jnp.float32) + b_in   # (TB, 32)

    row = jax.lax.broadcasted_iota(jnp.int32, (tb, RES_CH), 0)
    skip = jnp.zeros((tb, SKIP_CH), jnp.float32)

    # dilated causal residual blocks (fully unrolled)
    for l, d in enumerate(DILATIONS):
        shift = d * batch
        # causal shift: flat roll by d*B; rows with time < d get zeros, so the
        # wrap-around never leaks state across the batch boundary.
        h_shift = jnp.where(row >= shift, pltpu.roll(h, shift=shift, axis=0), 0.0)

        # fused filter+gate: [h | h_shift] @ [[wf1 wg1],[wf0 wg0]]
        hh = jnp.concatenate([h, h_shift], axis=1)                     # (TB, 64)
        w_fg = w_ref[OFF[f"wfg{l}"]:OFF[f"wfg{l}"] + 2 * RES_CH, :2 * RES_CH]
        b_fg = w_ref[OFF[f"bfg{l}"]:OFF[f"bfg{l}"] + 1, :2 * RES_CH]
        fg = jnp.dot(hh, w_fg, preferred_element_type=jnp.float32) + b_fg
        z = jnp.tanh(fg[:, :RES_CH]) * jax.nn.sigmoid(fg[:, RES_CH:])  # (TB, 32)

        # fused skip+residual: z @ [ws | wr]
        w_sr = w_ref[OFF[f"wsr{l}"]:OFF[f"wsr{l}"] + RES_CH, :SKIP_CH + RES_CH]
        b_sr = w_ref[OFF[f"bsr{l}"]:OFF[f"bsr{l}"] + 1, :SKIP_CH + RES_CH]
        sr = jnp.dot(z, w_sr, preferred_element_type=jnp.float32) + b_sr
        skip = skip + sr[:, :SKIP_CH]
        h = h + sr[:, SKIP_CH:]

    # output head: relu -> 1x1 -> relu -> 1x1 (lane-padded to 128 outputs)
    o = jnp.maximum(skip, 0.0)
    wo1 = w_ref[OFF["wo1"]:OFF["wo1"] + SKIP_CH, :SKIP_CH]
    bo1 = w_ref[OFF["bo1"]:OFF["bo1"] + 1, :SKIP_CH]
    o = jnp.maximum(jnp.dot(o, wo1, preferred_element_type=jnp.float32) + bo1, 0.0)
    wo2 = w_ref[OFF["wo2"]:OFF["wo2"] + SKIP_CH, :]                    # (32, 128)
    bo2 = w_ref[OFF["bo2"]:OFF["bo2"] + 1, :]
    out = jnp.dot(o, wo2, preferred_element_type=jnp.float32) + bo2    # (TB, 128)
    out_ref[...] = out.astype(out_ref.dtype)


def wavenet_pallas(x_flat, slab, *, batch):
    """x_flat: (T*B, IN_CH) f32 (time-major) -> (T*B, OUT_PAD) f32."""
    tb, cin = x_flat.shape
    return pl.pallas_call(
        functools.partial(wavenet_kernel, batch=batch),
        out_shape=jax.ShapeDtypeStruct((tb, OUT_PAD), jnp.float32),
        grid=(1,),
        in_specs=[pl.BlockSpec((tb, cin), lambda i: (0, 0)),
                  pl.BlockSpec((SLAB_ROWS, LANES), lambda i: (0, 0))],
        out_specs=pl.BlockSpec((tb, OUT_PAD), lambda i: (0, 0)),
        compiler_params=pltpu.CompilerParams(
            dimension_semantics=("arbitrary",)),
    )(x_flat, slab)


# ----------------------------- glue (plain JAX) ------------------------------
# TODO(synk): generate()/predict_sequence (autoregressive decode) is not implemented;
#             embedding gathers + concat stay in plain JAX (no Pallas gain at this size).
def wavenet_ts_forward(params, slab, src_ts, trg_ts, src_xdaysago, trg_xdaysago,
                       cat_encode, cat_decode, fixed_feat):
    enc_len = src_ts.shape[0]
    dec_len = trg_ts.shape[0]

    # get_embedding
    cat_enc_emb = params["cat_emb"][cat_encode]           # (E, B, CAT_EMB)
    cat_dec_emb = params["cat_emb"][cat_decode]           # (D, B, CAT_EMB)
    fixed_emb = params["fixed_emb"][fixed_feat][None]     # (1, B, FIXED_EMB)
    encode_input = jnp.concatenate(
        [src_ts, src_xdaysago, cat_enc_emb,
         jnp.broadcast_to(fixed_emb, (enc_len,) + fixed_emb.shape[1:])], axis=2)
    decode_input = jnp.concatenate(
        [trg_ts, trg_xdaysago, cat_dec_emb,
         jnp.broadcast_to(fixed_emb, (dec_len,) + fixed_emb.shape[1:])], axis=2)

    # merge_encode_decode_seq ≡ drop last decode step, concat along time.
    # Kept seq-first (T, B, C): a single reshape gives the time-major flat rows
    # the kernel wants, and the kernel output reshapes straight to (T, B, OUT).
    merged = jnp.concatenate([encode_input, decode_input[:-1]], axis=0)   # (T, B, C)
    T, B, C = merged.shape
    x_flat = merged.reshape(T * B, C).astype(jnp.float32)

    out_flat = wavenet_pallas(x_flat, slab, batch=B)       # (T*B, OUT_PAD)
    # wavenet(BCT) + permute(2,0,1) in torch == (T, B, OUT_CH) here
    return out_flat[:, :OUT_CH].reshape(T, B, OUT_CH)


# ------------------------ pure-JAX reference (check) -------------------------
def wavenet_reference(params, x_btc):
    h = jnp.einsum("btc,co->bto", x_btc, params["w_in"]) + params["b_in"]
    T = x_btc.shape[1]
    skip = jnp.zeros((x_btc.shape[0], T, SKIP_CH), jnp.float32)
    for l, d in enumerate(DILATIONS):
        pad = jnp.zeros((h.shape[0], d, RES_CH), h.dtype)
        h_shift = jnp.concatenate([pad, h[:, :T - d]], axis=1)
        f = (jnp.einsum("bto,oc->btc", h, params["wf1"][l])
             + jnp.einsum("bto,oc->btc", h_shift, params["wf0"][l]) + params["bf"][l])
        g = (jnp.einsum("bto,oc->btc", h, params["wg1"][l])
             + jnp.einsum("bto,oc->btc", h_shift, params["wg0"][l]) + params["bg"][l])
        z = jnp.tanh(f) * jax.nn.sigmoid(g)
        skip = skip + jnp.einsum("bto,oc->btc", z, params["ws"][l]) + params["bs"][l]
        h = h + jnp.einsum("bto,oc->btc", z, params["wr"][l]) + params["br"][l]
    o = jnp.maximum(skip, 0.0)
    o = jnp.einsum("bto,oc->btc", o, params["wo1"]) + params["bo1"]
    o = jnp.maximum(o, 0.0)
    return jnp.einsum("bto,oc->btc", o, params["wo2"]) + params["bo2"]


# ----------------------------- parameter init --------------------------------
def init_params(key):
    ks = jax.random.split(key, 20)
    s = 0.1
    return {
        "cat_emb":  jax.random.normal(ks[0], (CAT_VOCAB, CAT_EMB), jnp.float32) * s,
        "fixed_emb": jax.random.normal(ks[1], (FIXED_VOCAB, FIXED_EMB), jnp.float32) * s,
        "w_in": jax.random.normal(ks[2], (IN_CH, RES_CH), jnp.float32) * s,
        "b_in": jax.random.normal(ks[3], (1, RES_CH), jnp.float32) * s,
        "wf0": jax.random.normal(ks[4], (NUM_LAYERS, RES_CH, RES_CH), jnp.float32) * s,
        "wf1": jax.random.normal(ks[5], (NUM_LAYERS, RES_CH, RES_CH), jnp.float32) * s,
        "bf":  jax.random.normal(ks[6], (NUM_LAYERS, 1, RES_CH), jnp.float32) * s,
        "wg0": jax.random.normal(ks[7], (NUM_LAYERS, RES_CH, RES_CH), jnp.float32) * s,
        "wg1": jax.random.normal(ks[8], (NUM_LAYERS, RES_CH, RES_CH), jnp.float32) * s,
        "bg":  jax.random.normal(ks[9], (NUM_LAYERS, 1, RES_CH), jnp.float32) * s,
        "ws":  jax.random.normal(ks[10], (NUM_LAYERS, RES_CH, SKIP_CH), jnp.float32) * s,
        "bs":  jax.random.normal(ks[11], (NUM_LAYERS, 1, SKIP_CH), jnp.float32) * s,
        "wr":  jax.random.normal(ks[12], (NUM_LAYERS, RES_CH, RES_CH), jnp.float32) * s,
        "br":  jax.random.normal(ks[13], (NUM_LAYERS, 1, RES_CH), jnp.float32) * s,
        "wo1": jax.random.normal(ks[14], (SKIP_CH, SKIP_CH), jnp.float32) * s,
        "bo1": jax.random.normal(ks[15], (1, SKIP_CH), jnp.float32) * s,
        "wo2": jax.random.normal(ks[16], (SKIP_CH, OUT_CH), jnp.float32) * s,
        "bo2": jax.random.normal(ks[17], (1, OUT_CH), jnp.float32) * s,
    }


# ----------------------------------- main ------------------------------------
if __name__ == "__main__":
    key = jax.random.PRNGKey(0)
    params = init_params(key)
    slab = pack_wavenet_slab(params)       # packed once, reused every forward

    ks = jax.random.split(jax.random.PRNGKey(0), 8)
    src_ts = jax.random.normal(ks[1], (ENC_LEN, BATCH, TS_FEAT), jnp.float32)
    trg_ts = jax.random.normal(ks[2], (DEC_LEN, BATCH, TS_FEAT), jnp.float32)
    src_xdaysago = jax.random.normal(ks[3], (ENC_LEN, BATCH, XDAYS_FEAT), jnp.float32)
    trg_xdaysago = jax.random.normal(ks[4], (DEC_LEN, BATCH, XDAYS_FEAT), jnp.float32)
    cat_encode = jax.random.randint(ks[5], (ENC_LEN, BATCH), 0, CAT_VOCAB)
    cat_decode = jax.random.randint(ks[6], (DEC_LEN, BATCH), 0, CAT_VOCAB)
    fixed_feat = jax.random.randint(ks[7], (BATCH,), 0, FIXED_VOCAB)

    out = wavenet_ts_forward(params, slab, src_ts, trg_ts, src_xdaysago,
                             trg_xdaysago, cat_encode, cat_decode, fixed_feat)
    out = jax.block_until_ready(out)

    T = ENC_LEN + DEC_LEN - 1
    assert out.shape == (T, BATCH, OUT_CH), out.shape

    # sanity check vs pure-JAX reference of identical math (also validates packing)
    cat_enc_emb = params["cat_emb"][cat_encode]
    cat_dec_emb = params["cat_emb"][cat_decode]
    fixed_emb = params["fixed_emb"][fixed_feat][None]
    enc_in = jnp.concatenate([src_ts, src_xdaysago, cat_enc_emb,
                              jnp.broadcast_to(fixed_emb, (ENC_LEN, BATCH, FIXED_EMB))], axis=2)
    dec_in = jnp.concatenate([trg_ts, trg_xdaysago, cat_dec_emb,
                              jnp.broadcast_to(fixed_emb, (DEC_LEN, BATCH, FIXED_EMB))], axis=2)
    merged = jnp.concatenate([enc_in, dec_in[:-1]], axis=0)          # (T, B, C)
    x_btc = jnp.transpose(merged, (1, 0, 2))
    ref = jnp.transpose(wavenet_reference(params, x_btc), (1, 0, 2))  # (T, B, OUT)
    np.testing.assert_allclose(np.asarray(out), np.asarray(ref), rtol=1e-5, atol=1e-5)

    print("KERNEL_OK")
</pallas_src>

<mosaic_0001>
module attributes {stable_mosaic.version = 11 : i64} {
  func.func @wavenet_kernel(%arg0: i32, %arg1: memref<32x16xf32, #tpu.memory_space<vmem>>, %arg2: memref<440x128xf32, #tpu.memory_space<vmem>>, %arg3: memref<32x128xf32, #tpu.memory_space<vmem>>) attributes {dimension_semantics = [#tpu.dimension_semantics<arbitrary>], iteration_bounds = array<i64: 1>, scalar_prefetch = 0 : i64, scratch_operands = 0 : i64, tpu.core_type = #tpu.core_type<tc>, window_params = [{pipeline_mode = #tpu.pipeline_mode<synchronous>, transform_indices = @transform_0, window_bounds = array<i64: 32, 16>}, {pipeline_mode = #tpu.pipeline_mode<synchronous>, transform_indices = @transform_1, window_bounds = array<i64: 440, 128>}, {pipeline_mode = #tpu.pipeline_mode<synchronous>, transform_indices = @transform_2, window_bounds = array<i64: 32, 128>}]} {
    %c0 = arith.constant 0 : index
    %c0_0 = arith.constant 0 : index
    %0 = vector.load %arg1[%c0, %c0_0] : memref<32x16xf32, #tpu.memory_space<vmem>>, vector<32x16xf32>
    %c0_1 = arith.constant 0 : index
    %c0_2 = arith.constant 0 : index
    %1 = vector.load %arg2[%c0_1, %c0_2] : memref<440x128xf32, #tpu.memory_space<vmem>>, vector<16x32xf32>
    %c16 = arith.constant 16 : index
    %c0_3 = arith.constant 0 : index
    %2 = vector.load %arg2[%c16, %c0_3] : memref<440x128xf32, #tpu.memory_space<vmem>>, vector<1x32xf32>
    %cst = arith.constant dense<0.000000e+00> : vector<32x32xf32>
    %3 = tpu.matmul %0, %1, %cst {dimension_numbers = #tpu.dot_dimension_numbers<[1], [0], [0], [1], [0, 0, 1, 1], [], []>} : vector<32x16xf32>, vector<16x32xf32>, vector<32x32xf32> -> vector<32x32xf32>
    %4 = vector.broadcast %2 : vector<1x32xf32> to vector<32x32xf32>
    %5 = arith.addf %3, %4 : vector<32x32xf32>
    %6 = tpu.iota {dimensions = array<i32: 0>} : vector<32x32xi32>
    %cst_4 = arith.constant 0.000000e+00 : f32
    %7 = vector.broadcast %cst_4 : f32 to vector<32x32xf32>
    %c2_i32 = arith.constant 2 : i32
    %8 = vector.broadcast %c2_i32 : i32 to vector<32x32xi32>
    %9 = arith.cmpi sge, %6, %8 : vector<32x32xi32>
    %c2_i32_5 = arith.constant 2 : i32
    %10 = tpu.dynamic_rotate %5 by %c2_i32_5 dim 0 : vector<32x32xf32>, i32 -> vector<32x32xf32>
    %cst_6 = arith.constant 0.000000e+00 : f32
    %11 = vector.broadcast %cst_6 : f32 to vector<32x32xf32>
    %12 = arith.select %9, %10, %11 : vector<32x32xi1>, vector<32x32xf32>
    %13 = tpu.concatenate %5, %12 in 1 : vector<32x32xf32>, vector<32x32xf32> -> vector<32x64xf32>
    %c24 = arith.constant 24 : index
    %c0_7 = arith.constant 0 : index
    %14 = vector.load %arg2[%c24, %c0_7] : memref<440x128xf32, #tpu.memory_space<vmem>>, vector<64x64xf32>
    %c88 = arith.constant 88 : index
    %c0_8 = arith.constant 0 : index
    %15 = vector.load %arg2[%c88, %c0_8] : memref<440x128xf32, #tpu.memory_space<vmem>>, vector<1x64xf32>
    %cst_9 = arith.constant dense<0.000000e+00> : vector<32x64xf32>
    %16 = tpu.matmul %13, %14, %cst_9 {dimension_numbers = #tpu.dot_dimension_numbers<[1], [0], [0], [1], [0, 0, 1, 1], [], []>} : vector<32x64xf32>, vector<64x64xf32>, vector<32x64xf32> -> vector<32x64xf32>
    %17 = vector.broadcast %15 : vector<1x64xf32> to vector<32x64xf32>
    %18 = arith.addf %16, %17 : vector<32x64xf32>
    %19 = vector.extract_strided_slice %18 {offsets = [0, 0], sizes = [32, 32], strides = [1, 1]} : vector<32x64xf32> to vector<32x32xf32>
    %20 = math.tanh %19 : vector<32x32xf32>
    %21 = vector.extract_strided_slice %18 {offsets = [0, 32], sizes = [32, 32], strides = [1, 1]} : vector<32x64xf32> to vector<32x32xf32>
    %22 = arith.negf %21 : vector<32x32xf32>
    %23 = math.exp %22 : vector<32x32xf32>
    %cst_10 = arith.constant 1.000000e+00 : f32
    %24 = vector.broadcast %cst_10 : f32 to vector<32x32xf32>
    %25 = arith.addf %24, %23 : vector<32x32xf32>
    %26 = arith.divf %24, %25 : vector<32x32xf32>
    %27 = arith.mulf %20, %26 : vector<32x32xf32>
    %c96 = arith.constant 96 : index
    %c0_11 = arith.constant 0 : index
    %28 = vector.load %arg2[%c96, %c0_11] : memref<440x128xf32, #tpu.memory_space<vmem>>, vector<32x64xf32>
    %c128 = arith.constant 128 : index
    %c0_12 = arith.constant 0 : index
    %29 = vector.load %arg2[%c128, %c0_12] : memref<440x128xf32, #tpu.memory_space<vmem>>, vector<1x64xf32>
    %cst_13 = arith.constant dense<0.000000e+00> : vector<32x64xf32>
    %30 = tpu.matmul %27, %28, %cst_13 {dimension_numbers = #tpu.dot_dimension_numbers<[1], [0], [0], [1], [0, 0, 1, 1], [], []>} : vector<32x32xf32>, vector<32x64xf32>, vector<32x64xf32> -> vector<32x64xf32>
    %31 = vector.broadcast %29 : vector<1x64xf32> to vector<32x64xf32>
    %32 = arith.addf %30, %31 : vector<32x64xf32>
    %33 = vector.extract_strided_slice %32 {offsets = [0, 0], sizes = [32, 32], strides = [1, 1]} : vector<32x64xf32> to vector<32x32xf32>
    %34 = arith.addf %7, %33 : vector<32x32xf32>
    %35 = vector.extract_strided_slice %32 {offsets = [0, 32], sizes = [32, 32], strides = [1, 1]} : vector<32x64xf32> to vector<32x32xf32>
    %36 = arith.addf %5, %35 : vector<32x32xf32>
    %c4_i32 = arith.constant 4 : i32
    %37 = vector.broadcast %c4_i32 : i32 to vector<32x32xi32>
    %38 = arith.cmpi sge, %6, %37 : vector<32x32xi32>
    %c4_i32_14 = arith.constant 4 : i32
    %39 = tpu.dynamic_rotate %36 by %c4_i32_14 dim 0 : vector<32x32xf32>, i32 -> vector<32x32xf32>
    %cst_15 = arith.constant 0.000000e+00 : f32
    %40 = vector.broadcast %cst_15 : f32 to vector<32x32xf32>
    %41 = arith.select %38, %39, %40 : vector<32x32xi1>, vector<32x32xf32>
    %42 = tpu.concatenate %36, %41 in 1 : vector<32x32xf32>, vector<32x32xf32> -> vector<32x64xf32>
    %c136 = arith.constant 136 : index
    %c0_16 = arith.constant 0 : index
    %43 = vector.load %arg2[%c136, %c0_16] : memref<440x128xf32, #tpu.memory_space<vmem>>, vector<64x64xf32>
    %c200 = arith.constant 200 : index
    %c0_17 = arith.constant 0 : index
    %44 = vector.load %arg2[%c200, %c0_17] : memref<440x128xf32, #tpu.memory_space<vmem>>, vector<1x64xf32>
    %cst_18 = arith.constant dense<0.000000e+00> : vector<32x64xf32>
    %45 = tpu.matmul %42, %43, %cst_18 {dimension_numbers = #tpu.dot_dimension_numbers<[1], [0], [0], [1], [0, 0, 1, 1], [], []>} : vector<32x64xf32>, vector<64x64xf32>, vector<32x64xf32> -> vector<32x64xf32>
    %46 = vector.broadcast %44 : vector<1x64xf32> to vector<32x64xf32>
    %47 = arith.addf %45, %46 : vector<32x64xf32>
    %48 = vector.extract_strided_slice %47 {offsets = [0, 0], sizes = [32, 32], strides = [1, 1]} : vector<32x64xf32> to vector<32x32xf32>
    %49 = math.tanh %48 : vector<32x32xf32>
    %50 = vector.extract_strided_slice %47 {offsets = [0, 32], sizes = [32, 32], strides = [1, 1]} : vector<32x64xf32> to vector<32x32xf32>
    %51 = arith.negf %50 : vector<32x32xf32>
    %52 = math.exp %51 : vector<32x32xf32>
    %cst_19 = arith.constant 1.000000e+00 : f32
    %53 = vector.broadcast %cst_19 : f32 to vector<32x32xf32>
    %54 = arith.addf %53, %52 : vector<32x32xf32>
    %55 = arith.divf %53, %54 : vector<32x32xf32>
    %56 = arith.mulf %49, %55 : vector<32x32xf32>
    %c208 = arith.constant 208 : index
    %c0_20 = arith.constant 0 : index
    %57 = vector.load %arg2[%c208, %c0_20] : memref<440x128xf32, #tpu.memory_space<vmem>>, vector<32x64xf32>
    %c240 = arith.constant 240 : index
    %c0_21 = arith.constant 0 : index
    %58 = vector.load %arg2[%c240, %c0_21] : memref<440x128xf32, #tpu.memory_space<vmem>>, vector<1x64xf32>
    %cst_22 = arith.constant dense<0.000000e+00> : vector<32x64xf32>
    %59 = tpu.matmul %56, %57, %cst_22 {dimension_numbers = #tpu.dot_dimension_numbers<[1], [0], [0], [1], [0, 0, 1, 1], [], []>} : vector<32x32xf32>, vector<32x64xf32>, vector<32x64xf32> -> vector<32x64xf32>
    %60 = vector.broadcast %58 : vector<1x64xf32> to vector<32x64xf32>
    %61 = arith.addf %59, %60 : vector<32x64xf32>
    %62 = vector.extract_strided_slice %61 {offsets = [0, 0], sizes = [32, 32], strides = [1, 1]} : vector<32x64xf32> to vector<32x32xf32>
    %63 = arith.addf %34, %62 : vector<32x32xf32>
    %64 = vector.extract_strided_slice %61 {offsets = [0, 32], sizes = [32, 32], strides = [1, 1]} : vector<32x64xf32> to vector<32x32xf32>
    %65 = arith.addf %36, %64 : vector<32x32xf32>
    %c8_i32 = arith.constant 8 : i32
    %66 = vector.broadcast %c8_i32 : i32 to vector<32x32xi32>
    %67 = arith.cmpi sge, %6, %66 : vector<32x32xi32>
    %c8_i32_23 = arith.constant 8 : i32
    %68 = tpu.dynamic_rotate %65 by %c8_i32_23 dim 0 : vector<32x32xf32>, i32 -> vector<32x32xf32>
    %cst_24 = arith.constant 0.000000e+00 : f32
    %69 = vector.broadcast %cst_24 : f32 to vector<32x32xf32>
    %70 = arith.select %67, %68, %69 : vector<32x32xi1>, vector<32x32xf32>
    %71 = tpu.concatenate %65, %70 in 1 : vector<32x32xf32>, vector<32x32xf32> -> vector<32x64xf32>
    %c248 = arith.constant 248 : index
    %c0_25 = arith.constant 0 : index
    %72 = vector.load %arg2[%c248, %c0_25] : memref<440x128xf32, #tpu.memory_space<vmem>>, vector<64x64xf32>
    %c312 = arith.constant 312 : index
    %c0_26 = arith.constant 0 : index
    %73 = vector.load %arg2[%c312, %c0_26] : memref<440x128xf32, #tpu.memory_space<vmem>>, vector<1x64xf32>
    %cst_27 = arith.constant dense<0.000000e+00> : vector<32x64xf32>
    %74 = tpu.matmul %71, %72, %cst_27 {dimension_numbers = #tpu.dot_dimension_numbers<[1], [0], [0], [1], [0, 0, 1, 1], [], []>} : vector<32x64xf32>, vector<64x64xf32>, vector<32x64xf32> -> vector<32x64xf32>
    %75 = vector.broadcast %73 : vector<1x64xf32> to vector<32x64xf32>
    %76 = arith.addf %74, %75 : vector<32x64xf32>
    %77 = vector.extract_strided_slice %76 {offsets = [0, 0], sizes = [32, 32], strides = [1, 1]} : vector<32x64xf32> to vector<32x32xf32>
    %78 = math.tanh %77 : vector<32x32xf32>
    %79 = vector.extract_strided_slice %76 {offsets = [0, 32], sizes = [32, 32], strides = [1, 1]} : vector<32x64xf32> to vector<32x32xf32>
    %80 = arith.negf %79 : vector<32x32xf32>
    %81 = math.exp %80 : vector<32x32xf32>
    %cst_28 = arith.constant 1.000000e+00 : f32
    %82 = vector.broadcast %cst_28 : f32 to vector<32x32xf32>
    %83 = arith.addf %82, %81 : vector<32x32xf32>
    %84 = arith.divf %82, %83 : vector<32x32xf32>
    %85 = arith.mulf %78, %84 : vector<32x32xf32>
    %c320 = arith.constant 320 : index
    %c0_29 = arith.constant 0 : index
    %86 = vector.load %arg2[%c320, %c0_29] : memref<440x128xf32, #tpu.memory_space<vmem>>, vector<32x64xf32>
    %c352 = arith.constant 352 : index
    %c0_30 = arith.constant 0 : index
    %87 = vector.load %arg2[%c352, %c0_30] : memref<440x128xf32, #tpu.memory_space<vmem>>, vector<1x64xf32>
    %cst_31 = arith.constant dense<0.000000e+00> : vector<32x64xf32>
    %88 = tpu.matmul %85, %86, %cst_31 {dimension_numbers = #tpu.dot_dimension_numbers<[1], [0], [0], [1], [0, 0, 1, 1], [], []>} : vector<32x32xf32>, vector<32x64xf32>, vector<32x64xf32> -> vector<32x64xf32>
    %89 = vector.broadcast %87 : vector<1x64xf32> to vector<32x64xf32>
    %90 = arith.addf %88, %89 : vector<32x64xf32>
    %91 = vector.extract_strided_slice %90 {offsets = [0, 0], sizes = [32, 32], strides = [1, 1]} : vector<32x64xf32> to vector<32x32xf32>
    %92 = arith.addf %63, %91 : vector<32x32xf32>
    %cst_32 = arith.constant 0.000000e+00 : f32
    %93 = vector.broadcast %cst_32 : f32 to vector<32x32xf32>
    %94 = arith.maximumf %92, %93 : vector<32x32xf32>
    %c360 = arith.constant 360 : index
    %c0_33 = arith.constant 0 : index
    %95 = vector.load %arg2[%c360, %c0_33] : memref<440x128xf32, #tpu.memory_space<vmem>>, vector<32x32xf32>
    %c392 = arith.constant 392 : index
    %c0_34 = arith.constant 0 : index
    %96 = vector.load %arg2[%c392, %c0_34] : memref<440x128xf32, #tpu.memory_space<vmem>>, vector<1x32xf32>
    %cst_35 = arith.constant dense<0.000000e+00> : vector<32x32xf32>
    %97 = tpu.matmul %94, %95, %cst_35 {dimension_numbers = #tpu.dot_dimension_numbers<[1], [0], [0], [1], [0, 0, 1, 1], [], []>} : vector<32x32xf32>, vector<32x32xf32>, vector<32x32xf32> -> vector<32x32xf32>
    %98 = vector.broadcast %96 : vector<1x32xf32> to vector<32x32xf32>
    %99 = arith.addf %97, %98 : vector<32x32xf32>
    %cst_36 = arith.constant 0.000000e+00 : f32
    %100 = vector.broadcast %cst_36 : f32 to vector<32x32xf32>
    %101 = arith.maximumf %99, %100 : vector<32x32xf32>
    %c400 = arith.constant 400 : index
    %c0_37 = arith.constant 0 : index
    %102 = vector.load %arg2[%c400, %c0_37] : memref<440x128xf32, #tpu.memory_space<vmem>>, vector<32x128xf32>
    %c432 = arith.constant 432 : index
    %c0_38 = arith.constant 0 : index
    %103 = vector.load %arg2[%c432, %c0_38] : memref<440x128xf32, #tpu.memory_space<vmem>>, vector<1x128xf32>
    %cst_39 = arith.constant dense<0.000000e+00> : vector<32x128xf32>
    %104 = tpu.matmul %101, %102, %cst_39 {dimension_numbers = #tpu.dot_dimension_numbers<[1], [0], [0], [1], [0, 0, 1, 1], [], []>} : vector<32x32xf32>, vector<32x128xf32>, vector<32x128xf32> -> vector<32x128xf32>
    %105 = vector.broadcast %103 : vector<1x128xf32> to vector<32x128xf32>
    %106 = arith.addf %104, %105 : vector<32x128xf32>
    %c0_40 = arith.constant 0 : index
    %c0_41 = arith.constant 0 : index
    %107 = vector.load %arg3[%c0_40, %c0_41] : memref<32x128xf32, #tpu.memory_space<vmem>>, vector<32x128xf32>
    tpu.vector_store %arg3[%c0_40, %c0_41], %106 {strides = array<i32>} : memref<32x128xf32, #tpu.memory_space<vmem>>, vector<32x128xf32>,
    return
  }
  func.func @transform_0(%arg0: i32) -> (i32, i32) {
    %c0_i32 = arith.constant 0 : i32
    %c0_i32_0 = arith.constant 0 : i32
    %c0_i32_1 = arith.constant 0 : i32
    return %c0_i32, %c0_i32_0 : i32, i32
  }
  func.func @transform_1(%arg0: i32) -> (i32, i32) {
    %c0_i32 = arith.constant 0 : i32
    %c0_i32_0 = arith.constant 0 : i32
    %c0_i32_1 = arith.constant 0 : i32
    return %c0_i32, %c0_i32_0 : i32, i32
  }
  func.func @transform_2(%arg0: i32) -> (i32, i32) {
    %c0_i32 = arith.constant 0 : i32
    %c0_i32_0 = arith.constant 0 : i32
    %c0_i32_1 = arith.constant 0 : i32
    return %c0_i32, %c0_i32_0 : i32, i32
  }
}

</mosaic_0001>

<llo_original>
// kernel: tpu_custom_call.1
$region0: #{tpu_custom_call.1}
  #allocation0 [shape = 'u32[]', space=smem, size = 0x4, offset = 0x4, fixed_abs, tag = 'smem constant byte address 0x4 - core index']
  #allocation1 [shape = 'u32[144,128]{1,0:T(1,128)}', space=vmem, size = 0x12000, scoped, tag = 'internal scratch']
  %s0 = inlined_call_operand.vmem [shape: f32[32,16], index: 0, kind: input, shape index: {}]
  %s1 = inlined_call_operand.hbm [shape: f32[440,128], index: 1, kind: input, shape index: {}]
  %s2 = inlined_call_operand.hbm [shape: f32[32,128], index: 2, kind: output, shape index: {}]
  %s3 = sld [smem:[#allocation0]]
  $region22: #{tpu_custom_call.1} parent=0
    _
  %s5 = ssub.s32 1, %s3
  %s6 = scalar_select 0, %s5, %s3
  $region1: #{tpu_custom_call.1} parent=0
    #allocation2 [shape = 'u8[225280]{0}', space=vmem, size = 0x37000, scoped, tag = 'input window, operand 1, single buffered']
    #allocation3 [shape = 's32[1]{0}', space=sflag, size = 0x4, scoped, tag = 'scoped memory for tpu_custom_call.1']
    #allocation4 [shape = 's32[1]{0}', space=sflag, size = 0x4, scoped, tag = 'scoped memory for tpu_custom_call.1']
    #allocation5 [shape = 'u8[16384]{0}', space=vmem, size = 0x4000, scoped, tag = 'output window, operand 0, single buffered']
    %7 = vsyncpa [#allocation3], 0
    %8 = vsyncpa [#allocation4], 0
    // Predicated region
    $region2: #{tpu_custom_call.1} parent=1 // pred_check
      _
    $region3: #{tpu_custom_call.1} parent=1 // pred_check_branch
      %10 = sbr.rel (0) target = $region5
    $region4: #{tpu_custom_call.1} parent=1 // pred_region
      _
    $region5: #{tpu_custom_call.1} parent=1 // pred_fallthru
      _
    // Predicated region
    $region6: #{tpu_custom_call.1} parent=1 // pred_check
      _
    $region7: #{tpu_custom_call.1} parent=1 // pred_check_branch
      %12 = sbr.rel (0) target = $region9
    $region8: #{tpu_custom_call.1} parent=1 // pred_region
      %s14 = ssub.s32 7040, 7040
      %15 = vsyncadd [#allocation3], %s14
      %s16 = sshll.u32 [#allocation2], 4
      %s17 = int_to_ptr.vmem [resolvable:$true] %s16
      %22 = dma.hbm_to_vmem [thread:$0]  %s1, 7040, %s17, [#allocation3], 128, 128, 8
    $region9: #{tpu_custom_call.1} parent=1 // pred_fallthru
      _
    // Predicated region
    $region10: #{tpu_custom_call.1} parent=1 // pred_check
      _
    $region11: #{tpu_custom_call.1} parent=1 // pred_check_branch
      %24 = sbr.rel (0) target = $region13
    $region12: #{tpu_custom_call.1} parent=1 // pred_region
      %25 = dma.done [#allocation3], 7040
    $region13: #{tpu_custom_call.1} parent=1 // pred_fallthru
      _
    %v26 = vld [vmem:[%s0] sm:$0xff]
    %v27 = vld [vmem:[%s0 + $0x8] sm:$0xff]
    %v28 = vld [vmem:[%s0 + $0x10] sm:$0xff]
    %v29 = vld [vmem:[%s0 + $0x18] sm:$0xff]
    %v30 = vld [vmem:[#allocation2] sm:$0xff]
    %v31 = vld [vmem:[#allocation2 + $0x8] sm:$0xff]
    %v32 = vld [vmem:[#allocation2 + $0x10] sm:$0x1]
    %v33 = vlaneseq
    %v34 = vshrl.u32 %v33, 7
    %v35 = vsub.s32 0, %v34
    %v36 = vrot.slane %v32, %v35
    %vm37 = vcmask 130048
    %v39 = vsel %vm37, %v26, 0
    %v42 = vsel %vm37, %v27, 0
    %v45 = vsel %vm37, %v28, 0
    %v48 = vsel %vm37, %v29, 0
    %50 = vmatprep.subr.mxu0 0.0
    %51 = vmatpush1.msra.mxu0 %v30
    %52 = vmatprep.subr.mxu0 0.0
    %53 = vmatpush1.msra.mxu0 %v31
    %54 = vmatprep.subr.mxu0 0.0
    %55 = vmatpush1.msra.mxu0 0.0
    %56 = vmatprep.subr.mxu0 0.0
    %57 = vmatpush1.msra.mxu0 0.0
    %58 = vmatprep.subr.mxu0 0.0
    %59 = vmatpush1.msra.mxu0 0.0
    %60 = vmatprep.subr.mxu0 0.0
    %61 = vmatpush1.msra.mxu0 0.0
    %62 = vmatprep.subr.mxu0 0.0
    %63 = vmatpush1.msra.mxu0 0.0
    %64 = vmatprep.subr.mxu0 0.0
    %65 = vmatpush1.msra.mxu0 0.0
    %66 = vmatprep.subr.mxu0 0.0
    %67 = vmatpush1.msra.mxu0 0.0
    %68 = vmatprep.subr.mxu0 0.0
    %69 = vmatpush1.msra.mxu0 0.0
    %70 = vmatprep.subr.mxu0 0.0
    %71 = vmatpush1.msra.mxu0 0.0
    %72 = vmatprep.subr.mxu0 0.0
    %73 = vmatpush1.msra.mxu0 0.0
    %74 = vmatprep.subr.mxu0 0.0
    %75 = vmatpush1.msra.mxu0 0.0
    %76 = vmatprep.subr.mxu0 0.0
    %77 = vmatpush1.msra.mxu0 0.0
    %78 = vmatprep.subr.mxu0 0.0
    %79 = vmatpush1.msra.mxu0 0.0
    %80 = vmatprep.subr.mxu0 0.0
    %81 = vmatpush1.msra.mxu0 0.0
    %82 = vmatprep.subr.mxu0 0.0
    %83 = vmatpush1.msra.mxu0 0.0
    %84 = vmatprep.subr.mxu0 0.0
    %85 = vmatpush1.msra.mxu0 0.0
    %86 = vmatprep.subr.mxu0 0.0
    %87 = vmatpush1.msra.mxu0 0.0
    %88 = vmatprep.subr.mxu0 0.0
    %89 = vmatpush1.msra.mxu0 0.0
    %90 = vmatprep.subr.mxu0 0.0
    %91 = vmatpush1.msra.mxu0 0.0
    %92 = vmatprep.subr.mxu0 0.0
    %93 = vmatpush1.msra.mxu0 0.0
    %94 = vmatprep.subr.mxu0 0.0
    %95 = vmatpush1.msra.mxu0 0.0
    %96 = vmatprep.subr.mxu0 0.0
    %97 = vmatpush1.msra.mxu0 0.0
    %98 = vmatprep.subr.mxu0 0.0
    %99 = vmatpush1.msra.mxu0 0.0
    %100 = vmatprep.subr.mxu0 0.0
    %101 = vmatpush1.msra.mxu0 0.0
    %102 = vmatprep.subr.mxu0 0.0
    %103 = vmatpush1.msra.mxu0 0.0
    %104 = vmatprep.subr.mxu0 0.0
    %105 = vmatpush1.msra.mxu0 0.0
    %106 = vmatprep.subr.mxu0 0.0
    %107 = vmatpush1.msra.mxu0 0.0
    %108 = vmatprep.subr.mxu0 0.0
    %109 = vmatpush1.msra.mxu0 0.0
    %110 = vmatprep.subr.mxu0 0.0
    %111 = vmatpush1.msra.mxu0 0.0
    %112 = vmatprep.subr.mxu0 0.0
    %113 = vmatpush1.msra.mxu0 0.0
    %114 = vmatprep.mubr.f32.mxu0 0.0
    %115 = vmatmul.mubr.f32.gmra.mrb[0].mxu0 %v39
    %v116 = vpop.f32.mrb[0].mxu0
    %v117 = vadd.f32 %v36, %v116
    %v118 = vpop.f32.mrb[0].mxu0
    %119 = vmatprep.mubr.f32.mxu0 0.0
    %120 = vmatmul.mubr.f32.gmra.mrb[0].mxu0 %v42
    %v121 = vpop.f32.mrb[0].mxu0
    %v122 = vadd.f32 %v36, %v121
    %v123 = vpop.f32.mrb[0].mxu0
    %124 = vmatprep.mubr.f32.mxu0 0.0
    %125 = vmatmul.mubr.f32.gmra.mrb[0].mxu0 %v45
    %v126 = vpop.f32.mrb[0].mxu0
    %v127 = vadd.f32 %v36, %v126
    %v128 = vpop.f32.mrb[0].mxu0
    %129 = vmatprep.mubr.f32.mxu0 0.0
    %130 = vmatmul.mubr.f32.gmra.mrb[0].mxu0 %v48
    %v131 = vpop.f32.mrb[0].mxu0
    %v132 = vadd.f32 %v36, %v131
    %v133 = vpop.f32.mrb[0].mxu0
    %134 = vdwg.mxu0
    %v135 = vlaneseq
    %v136 = vshrl.u32 %v135, 7
    %v137 = vadd.s32 %v136, 8
    %v138 = vadd.s32 %v136, 16
    %v139 = vadd.s32 %v136, 24
    %vm140 = vcmp.ge.s32.totalorder %v136, 2
    %vm141 = vcmp.ge.s32.totalorder %v137, 2
    %vm142 = vcmp.ge.s32.totalorder %v138, 2
    %vm143 = vcmp.ge.s32.totalorder %v139, 2
    %v144 = vrot.slane %v117, 6
    %v145 = vrot.slane %v122, 6
    %v146 = vrot.slane %v127, 6
    %v147 = vrot.slane %v132, 6
    %vm148 = vcmp.lt.s32.totalorder %v136, 2
    %v149 = vsel %vm148, %v146, %v147
    %v150 = vsel %vm148, %v145, %v146
    %v151 = vsel %vm148, %v144, %v145
    %v152 = vsel %vm148, %v147, %v144
    %v153 = vsel %vm140, %v152, 0.0
    %v154 = vsel %vm141, %v151, 0.0
    %v155 = vsel %vm142, %v150, 0.0
    %v156 = vsel %vm143, %v149, 0.0
    %161 = vrot.lane.b32.xlu0 %v153, 32
    %v162 = vpop.permute.xlu0 %161
    %163 = vrot.lane.b32.xlu0 %v154, 32
    %v164 = vpop.permute.xlu0 %163
    %165 = vrot.lane.b32.xlu0 %v155, 32
    %v166 = vpop.permute.xlu0 %165
    %167 = vrot.lane.b32.xlu0 %v156, 32
    %v168 = vpop.permute.xlu0 %167
    %vm173 = vcmask 261120
    %v174 = vsel %vm173, %v117, %v162
    %v175 = vsel %vm173, %v122, %v164
    %v176 = vsel %vm173, %v127, %v166
    %v177 = vsel %vm173, %v132, %v168
    %v178 = vld [vmem:[#allocation2 + $0x18] sm:$0xff]
    %v179 = vld [vmem:[#allocation2 + $0x20] sm:$0xff]
    %v180 = vld [vmem:[#allocation2 + $0x28] sm:$0xff]
    %v181 = vld [vmem:[#allocation2 + $0x30] sm:$0xff]
    %v182 = vld [vmem:[#allocation2 + $0x38] sm:$0xff]
    %v183 = vld [vmem:[#allocation2 + $0x40] sm:$0xff]
    %v184 = vld [vmem:[#allocation2 + $0x48] sm:$0xff]
    %v185 = vld [vmem:[#allocation2 + $0x50] sm:$0xff]
    %v186 = vld [vmem:[#allocation2 + $0x58] sm:$0x1]
    %v187 = vlaneseq
    %v188 = vshrl.u32 %v187, 7
    %v189 = vsub.s32 0, %v188
    %v190 = vrot.slane %v186, %v189
    %vm191 = vcmask 523264
    %v193 = vsel %vm191, %v174, 0
    %v196 = vsel %vm191, %v175, 0
    %v199 = vsel %vm191, %v176, 0
    %v202 = vsel %vm191, %v177, 0
    %204 = vmatprep.subr.mxu0 0.0
    %205 = vmatpush1.msra.mxu0 %v178
    %206 = vmatprep.subr.mxu0 0.0
    %207 = vmatpush1.msra.mxu0 %v179
    %208 = vmatprep.subr.mxu0 0.0
    %209 = vmatpush1.msra.mxu0 %v180
    %210 = vmatprep.subr.mxu0 0.0
    %211 = vmatpush1.msra.mxu0 %v181
    %212 = vmatprep.subr.mxu0 0.0
    %213 = vmatpush1.msra.mxu0 %v182
    %214 = vmatprep.subr.mxu0 0.0
    %215 = vmatpush1.msra.mxu0 %v183
    %216 = vmatprep.subr.mxu0 0.0
    %217 = vmatpush1.msra.mxu0 %v184
    %218 = vmatprep.subr.mxu0 0.0
    %219 = vmatpush1.msra.mxu0 %v185
    %220 = vmatprep.subr.mxu0 0.0
    %221 = vmatpush1.msra.mxu0 0.0
    %222 = vmatprep.subr.mxu0 0.0
    %223 = vmatpush1.msra.mxu0 0.0
    %224 = vmatprep.subr.mxu0 0.0
    %225 = vmatpush1.msra.mxu0 0.0
    %226 = vmatprep.subr.mxu0 0.0
    %227 = vmatpush1.msra.mxu0 0.0
    %228 = vmatprep.subr.mxu0 0.0
    %229 = vmatpush1.msra.mxu0 0.0
    %230 = vmatprep.subr.mxu0 0.0
    %231 = vmatpush1.msra.mxu0 0.0
    %232 = vmatprep.subr.mxu0 0.0
    %233 = vmatpush1.msra.mxu0 0.0
    %234 = vmatprep.subr.mxu0 0.0
    %235 = vmatpush1.msra.mxu0 0.0
    %236 = vmatprep.subr.mxu0 0.0
    %237 = vmatpush1.msra.mxu0 0.0
    %238 = vmatprep.subr.mxu0 0.0
    %239 = vmatpush1.msra.mxu0 0.0
    %240 = vmatprep.subr.mxu0 0.0
    %241 = vmatpush1.msra.mxu0 0.0
    %242 = vmatprep.subr.mxu0 0.0
    %243 = vmatpush1.msra.mxu0 0.0
    %244 = vmatprep.subr.mxu0 0.0
    %245 = vmatpush1.msra.mxu0 0.0
    %246 = vmatprep.subr.mxu0 0.0
    %247 = vmatpush1.msra.mxu0 0.0
    %248 = vmatprep.subr.mxu0 0.0
    %249 = vmatpush1.msra.mxu0 0.0
    %250 = vmatprep.subr.mxu0 0.0
    %251 = vmatpush1.msra.mxu0 0.0
    %252 = vmatprep.subr.mxu0 0.0
    %253 = vmatpush1.msra.mxu0 0.0
    %254 = vmatprep.subr.mxu0 0.0
    %255 = vmatpush1.msra.mxu0 0.0
    %256 = vmatprep.subr.mxu0 0.0
    %257 = vmatpush1.msra.mxu0 0.0
    %258 = vmatprep.subr.mxu0 0.0
    %259 = vmatpush1.msra.mxu0 0.0
    %260 = vmatprep.subr.mxu0 0.0
    %261 = vmatpush1.msra.mxu0 0.0
    %262 = vmatprep.subr.mxu0 0.0
    %263 = vmatpush1.msra.mxu0 0.0
    %264 = vmatprep.subr.mxu0 0.0
    %265 = vmatpush1.msra.mxu0 0.0
    %266 = vmatprep.subr.mxu0 0.0
    %267 = vmatpush1.msra.mxu0 0.0
    %268 = vmatprep.mubr.f32.mxu0 0.0
    %269 = vmatmul.mubr.f32.gmra.mrb[0].mxu0 %v193
    %v270 = vpop.f32.mrb[0].mxu0
    %v271 = vadd.f32 %v190, %v270
    %v272 = vpop.f32.mrb[0].mxu0
    %273 = vmatprep.mubr.f32.mxu0 0.0
    %274 = vmatmul.mubr.f32.gmra.mrb[0].mxu0 %v196
    %v275 = vpop.f32.mrb[0].mxu0
    %v276 = vadd.f32 %v190, %v275
    %v277 = vpop.f32.mrb[0].mxu0
    %278 = vmatprep.mubr.f32.mxu0 0.0
    %279 = vmatmul.mubr.f32.gmra.mrb[0].mxu0 %v199
    %v280 = vpop.f32.mrb[0].mxu0
    %v281 = vadd.f32 %v190, %v280
    %v282 = vpop.f32.mrb[0].mxu0
    %283 = vmatprep.mubr.f32.mxu0 0.0
    %284 = vmatmul.mubr.f32.gmra.mrb[0].mxu0 %v202
    %v285 = vpop.f32.mrb[0].mxu0
    %v286 = vadd.f32 %v190, %v285
    %v287 = vpop.f32.mrb[0].mxu0
    %288 = vdwg.mxu0
    %v289 = vtanh.pop %v271
    %v290 = vtanh.pop %v276
    %v291 = vtanh.pop %v281
    %v292 = vtanh.pop %v286
    %v293 = vxor.u32 %v271, 2147483648
    %v294 = vxor.u32 %v276, 2147483648
    %v295 = vxor.u32 %v281, 2147483648
    %v296 = vxor.u32 %v286, 2147483648
    %v297 = vmul.f32 %v293, 1.442695
    %v298 = vpow.pop %v297
    %v299 = vmul.f32 %v294, 1.442695
    %v300 = vpow.pop %v299
    %v301 = vmul.f32 %v295, 1.442695
    %v302 = vpow.pop %v301
    %v303 = vmul.f32 %v296, 1.442695
    %v304 = vpow.pop %v303
    %v305 = vadd.f32 %v298, 1.0
    %v306 = vadd.f32 %v300, 1.0
    %v307 = vadd.f32 %v302, 1.0
    %v308 = vadd.f32 %v304, 1.0
    %v309 = vrcp.pop %v305
    %v310 = vmul.f32 1.0, %v309
    %v311 = vrcp.pop %v306
    %v312 = vmul.f32 1.0, %v311
    %v313 = vrcp.pop %v307
    %v314 = vmul.f32 1.0, %v313
    %v315 = vrcp.pop %v308
    %v316 = vmul.f32 1.0, %v315
    %321 = vrot.lane.b32.xlu0 %v310, 96
    %v322 = vpop.permute.xlu0 %321
    %323 = vrot.lane.b32.xlu0 %v312, 96
    %v324 = vpop.permute.xlu0 %323
    %325 = vrot.lane.b32.xlu0 %v314, 96
    %v326 = vpop.permute.xlu0 %325
    %327 = vrot.lane.b32.xlu0 %v316, 96
    %v328 = vpop.permute.xlu0 %327
    %v333 = vmul.f32 %v289, %v322
    %v334 = vmul.f32 %v290, %v324
    %v335 = vmul.f32 %v291, %v326
    %v336 = vmul.f32 %v292, %v328
    %v337 = vld [vmem:[#allocation2 + $0x60] sm:$0xff]
    %v338 = vld [vmem:[#allocation2 + $0x68] sm:$0xff]
    %v339 = vld [vmem:[#allocation2 + $0x70] sm:$0xff]
    %v340 = vld [vmem:[#allocation2 + $0x78] sm:$0xff]
    %v341 = vld [vmem:[#allocation2 + $0x80] sm:$0x1]
    %v342 = vlaneseq
    %v343 = vshrl.u32 %v342, 7
    %v344 = vsub.s32 0, %v343
    %v345 = vrot.slane %v341, %v344
    %v347 = vsel %vm173, %v333, 0
    %v350 = vsel %vm173, %v334, 0
    %v353 = vsel %vm173, %v335, 0
    %v356 = vsel %vm173, %v336, 0
    %358 = vmatprep.subr.mxu0 0.0
    %359 = vmatpush1.msra.mxu0 %v337
    %360 = vmatprep.subr.mxu0 0.0
    %361 = vmatpush1.msra.mxu0 %v338
    %362 = vmatprep.subr.mxu0 0.0
    %363 = vmatpush1.msra.mxu0 %v339
    %364 = vmatprep.subr.mxu0 0.0
    %365 = vmatpush1.msra.mxu0 %v340
    %366 = vmatprep.subr.mxu0 0.0
    %367 = vmatpush1.msra.mxu0 0.0
    %368 = vmatprep.subr.mxu0 0.0
    %369 = vmatpush1.msra.mxu0 0.0
    %370 = vmatprep.subr.mxu0 0.0
    %371 = vmatpush1.msra.mxu0 0.0
    %372 = vmatprep.subr.mxu0 0.0
    %373 = vmatpush1.msra.mxu0 0.0
    %374 = vmatprep.subr.mxu0 0.0
    %375 = vmatpush1.msra.mxu0 0.0
    %376 = vmatprep.subr.mxu0 0.0
    %377 = vmatpush1.msra.mxu0 0.0
    %378 = vmatprep.subr.mxu0 0.0
    %379 = vmatpush1.msra.mxu0 0.0
    %380 = vmatprep.subr.mxu0 0.0
    %381 = vmatpush1.msra.mxu0 0.0
    %382 = vmatprep.subr.mxu0 0.0
    %383 = vmatpush1.msra.mxu0 0.0
    %384 = vmatprep.subr.mxu0 0.0
    %385 = vmatpush1.msra.mxu0 0.0
    %386 = vmatprep.subr.mxu0 0.0
    %387 = vmatpush1.msra.mxu0 0.0
    %388 = vmatprep.subr.mxu0 0.0
    %389 = vmatpush1.msra.mxu0 0.0
    %390 = vmatprep.subr.mxu0 0.0
    %391 = vmatpush1.msra.mxu0 0.0
    %392 = vmatprep.subr.mxu0 0.0
    %393 = vmatpush1.msra.mxu0 0.0
    %394 = vmatprep.subr.mxu0 0.0
    %395 = vmatpush1.msra.mxu0 0.0
    %396 = vmatprep.subr.mxu0 0.0
    %397 = vmatpush1.msra.mxu0 0.0
    %398 = vmatprep.subr.mxu0 0.0
    %399 = vmatpush1.msra.mxu0 0.0
    %400 = vmatprep.subr.mxu0 0.0
    %401 = vmatpush1.msra.mxu0 0.0
    %402 = vmatprep.subr.mxu0 0.0
    %403 = vmatpush1.msra.mxu0 0.0
    %404 = vmatprep.subr.mxu0 0.0
    %405 = vmatpush1.msra.mxu0 0.0
    %406 = vmatprep.subr.mxu0 0.0
    %407 = vmatpush1.msra.mxu0 0.0
    %408 = vmatprep.subr.mxu0 0.0
    %409 = vmatpush1.msra.mxu0 0.0
    %410 = vmatprep.subr.mxu0 0.0
    %411 = vmatpush1.msra.mxu0 0.0
    %412 = vmatprep.subr.mxu0 0.0
    %413 = vmatpush1.msra.mxu0 0.0
    %414 = vmatprep.subr.mxu0 0.0
    %415 = vmatpush1.msra.mxu0 0.0
    %416 = vmatprep.subr.mxu0 0.0
    %417 = vmatpush1.msra.mxu0 0.0
    %418 = vmatprep.subr.mxu0 0.0
    %419 = vmatpush1.msra.mxu0 0.0
    %420 = vmatprep.subr.mxu0 0.0
    %421 = vmatpush1.msra.mxu0 0.0
    %422 = vmatprep.mubr.f32.mxu0 0.0
    %423 = vmatmul.mubr.f32.gmra.mrb[0].mxu0 %v347
    %v424 = vpop.f32.mrb[0].mxu0
    %v425 = vadd.f32 %v345, %v424
    %v426 = vpop.f32.mrb[0].mxu0
    %427 = vmatprep.mubr.f32.mxu0 0.0
    %428 = vmatmul.mubr.f32.gmra.mrb[0].mxu0 %v350
    %v429 = vpop.f32.mrb[0].mxu0
    %v430 = vadd.f32 %v345, %v429
    %v431 = vpop.f32.mrb[0].mxu0
    %432 = vmatprep.mubr.f32.mxu0 0.0
    %433 = vmatmul.mubr.f32.gmra.mrb[0].mxu0 %v353
    %v434 = vpop.f32.mrb[0].mxu0
    %v435 = vadd.f32 %v345, %v434
    %v436 = vpop.f32.mrb[0].mxu0
    %437 = vmatprep.mubr.f32.mxu0 0.0
    %438 = vmatmul.mubr.f32.gmra.mrb[0].mxu0 %v356
    %v439 = vpop.f32.mrb[0].mxu0
    %v440 = vadd.f32 %v345, %v439
    %v441 = vpop.f32.mrb[0].mxu0
    %442 = vdwg.mxu0
    %v443 = vadd.f32 %v425, 0.0
    %v444 = vadd.f32 %v430, 0.0
    %v445 = vadd.f32 %v435, 0.0
    %v446 = vadd.f32 %v440, 0.0
    %451 = vrot.lane.b32.xlu0 %v425, 96
    %v452 = vpop.permute.xlu0 %451
    %453 = vrot.lane.b32.xlu0 %v430, 96
    %v454 = vpop.permute.xlu0 %453
    %455 = vrot.lane.b32.xlu0 %v435, 96
    %v456 = vpop.permute.xlu0 %455
    %457 = vrot.lane.b32.xlu0 %v440, 96
    %v458 = vpop.permute.xlu0 %457
    %v463 = vadd.f32 %v117, %v452
    %v464 = vadd.f32 %v122, %v454
    %v465 = vadd.f32 %v127, %v456
    %v466 = vadd.f32 %v132, %v458
    %vm467 = vcmp.ge.s32.totalorder %v136, 4
    %vm468 = vcmp.ge.s32.totalorder %v137, 4
    %vm469 = vcmp.ge.s32.totalorder %v138, 4
    %vm470 = vcmp.ge.s32.totalorder %v139, 4
    %v471 = vrot.slane %v463, 4
    %v472 = vrot.slane %v464, 4
    %v473 = vrot.slane %v465, 4
    %v474 = vrot.slane %v466, 4
    %vm475 = vcmp.lt.s32.totalorder %v136, 4
    %v476 = vsel %vm475, %v473, %v474
    %v477 = vsel %vm475, %v472, %v473
    %v478 = vsel %vm475, %v471, %v472
    %v479 = vsel %vm475, %v474, %v471
    %v480 = vsel %vm467, %v479, 0.0
    %v481 = vsel %vm468, %v478, 0.0
    %v482 = vsel %vm469, %v477, 0.0
    %v483 = vsel %vm470, %v476, 0.0
    %488 = vrot.lane.b32.xlu0 %v480, 32
    %v489 = vpop.permute.xlu0 %488
    %490 = vrot.lane.b32.xlu0 %v481, 32
    %v491 = vpop.permute.xlu0 %490
    %492 = vrot.lane.b32.xlu0 %v482, 32
    %v493 = vpop.permute.xlu0 %492
    %494 = vrot.lane.b32.xlu0 %v483, 32
    %v495 = vpop.permute.xlu0 %494
    %v500 = vsel %vm173, %v463, %v489
    %v501 = vsel %vm173, %v464, %v491
    %v502 = vsel %vm173, %v465, %v493
    %v503 = vsel %vm173, %v466, %v495
    %v504 = vld [vmem:[#allocation2 + $0x88] sm:$0xff]
    %v505 = vld [vmem:[#allocation2 + $0x90] sm:$0xff]
    %v506 = vld [vmem:[#allocation2 + $0x98] sm:$0xff]
    %v507 = vld [vmem:[#allocation2 + $0xa0] sm:$0xff]
    %v508 = vld [vmem:[#allocation2 + $0xa8] sm:$0xff]
    %v509 = vld [vmem:[#allocation2 + $0xb0] sm:$0xff]
    %v510 = vld [vmem:[#allocation2 + $0xb8] sm:$0xff]
    %v511 = vld [vmem:[#allocation2 + $0xc0] sm:$0xff]
    %v512 = vld [vmem:[#allocation2 + $0xc8] sm:$0x1]
    %v513 = vlaneseq
    %v514 = vshrl.u32 %v513, 7
    %v515 = vsub.s32 0, %v514
    %v516 = vrot.slane %v512, %v515
    %v518 = vsel %vm191, %v500, 0
    %v521 = vsel %vm191, %v501, 0
    %v524 = vsel %vm191, %v502, 0
    %v527 = vsel %vm191, %v503, 0
    %529 = vmatprep.subr.mxu0 0.0
    %530 = vmatpush1.msra.mxu0 %v504
    %531 = vmatprep.subr.mxu0 0.0
    %532 = vmatpush1.msra.mxu0 %v505
    %533 = vmatprep.subr.mxu0 0.0
    %534 = vmatpush1.msra.mxu0 %v506
    %535 = vmatprep.subr.mxu0 0.0
    %536 = vmatpush1.msra.mxu0 %v507
    %537 = vmatprep.subr.mxu0 0.0
    %538 = vmatpush1.msra.mxu0 %v508
    %539 = vmatprep.subr.mxu0 0.0
    %540 = vmatpush1.msra.mxu0 %v509
    %541 = vmatprep.subr.mxu0 0.0
    %542 = vmatpush1.msra.mxu0 %v510
    %543 = vmatprep.subr.mxu0 0.0
    %544 = vmatpush1.msra.mxu0 %v511
    %545 = vmatprep.subr.mxu0 0.0
    %546 = vmatpush1.msra.mxu0 0.0
    %547 = vmatprep.subr.mxu0 0.0
    %548 = vmatpush1.msra.mxu0 0.0
    %549 = vmatprep.subr.mxu0 0.0
    %550 = vmatpush1.msra.mxu0 0.0
    %551 = vmatprep.subr.mxu0 0.0
    %552 = vmatpush1.msra.mxu0 0.0
    %553 = vmatprep.subr.mxu0 0.0
    %554 = vmatpush1.msra.mxu0 0.0
    %555 = vmatprep.subr.mxu0 0.0
    %556 = vmatpush1.msra.mxu0 0.0
    %557 = vmatprep.subr.mxu0 0.0
    %558 = vmatpush1.msra.mxu0 0.0
    %559 = vmatprep.subr.mxu0 0.0
    %560 = vmatpush1.msra.mxu0 0.0
    %561 = vmatprep.subr.mxu0 0.0
    %562 = vmatpush1.msra.mxu0 0.0
    %563 = vmatprep.subr.mxu0 0.0
    %564 = vmatpush1.msra.mxu0 0.0
    %565 = vmatprep.subr.mxu0 0.0
    %566 = vmatpush1.msra.mxu0 0.0
    %567 = vmatprep.subr.mxu0 0.0
    %568 = vmatpush1.msra.mxu0 0.0
    %569 = vmatprep.subr.mxu0 0.0
    %570 = vmatpush1.msra.mxu0 0.0
    %571 = vmatprep.subr.mxu0 0.0
    %572 = vmatpush1.msra.mxu0 0.0
    %573 = vmatprep.subr.mxu0 0.0
    %574 = vmatpush1.msra.mxu0 0.0
    %575 = vmatprep.subr.mxu0 0.0
    %576 = vmatpush1.msra.mxu0 0.0
    %577 = vmatprep.subr.mxu0 0.0
    %578 = vmatpush1.msra.mxu0 0.0
    %579 = vmatprep.subr.mxu0 0.0
    %580 = vmatpush1.msra.mxu0 0.0
    %581 = vmatprep.subr.mxu0 0.0
    %582 = vmatpush1.msra.mxu0 0.0
    %583 = vmatprep.subr.mxu0 0.0
    %584 = vmatpush1.msra.mxu0 0.0
    %585 = vmatprep.subr.mxu0 0.0
    %586 = vmatpush1.msra.mxu0 0.0
    %587 = vmatprep.subr.mxu0 0.0
    %588 = vmatpush1.msra.mxu0 0.0
    %589 = vmatprep.subr.mxu0 0.0
    %590 = vmatpush1.msra.mxu0 0.0
    %591 = vmatprep.subr.mxu0 0.0
    %592 = vmatpush1.msra.mxu0 0.0
    %593 = vmatprep.mubr.f32.mxu0 0.0
    %594 = vmatmul.mubr.f32.gmra.mrb[0].mxu0 %v518
    %v595 = vpop.f32.mrb[0].mxu0
    %v596 = vadd.f32 %v516, %v595
    %v597 = vpop.f32.mrb[0].mxu0
    %598 = vmatprep.mubr.f32.mxu0 0.0
    %599 = vmatmul.mubr.f32.gmra.mrb[0].mxu0 %v521
    %v600 = vpop.f32.mrb[0].mxu0
    %v601 = vadd.f32 %v516, %v600
    %v602 = vpop.f32.mrb[0].mxu0
    %603 = vmatprep.mubr.f32.mxu0 0.0
    %604 = vmatmul.mubr.f32.gmra.mrb[0].mxu0 %v524
    %v605 = vpop.f32.mrb[0].mxu0
    %v606 = vadd.f32 %v516, %v605
    %v607 = vpop.f32.mrb[0].mxu0
    %608 = vmatprep.mubr.f32.mxu0 0.0
    %609 = vmatmul.mubr.f32.gmra.mrb[0].mxu0 %v527
    %v610 = vpop.f32.mrb[0].mxu0
    %v611 = vadd.f32 %v516, %v610
    %v612 = vpop.f32.mrb[0].mxu0
    %613 = vdwg.mxu0
    %v614 = vtanh.pop %v596
    %v615 = vtanh.pop %v601
    %v616 = vtanh.pop %v606
    %v617 = vtanh.pop %v611
    %v618 = vxor.u32 %v596, 2147483648
    %v619 = vxor.u32 %v601, 2147483648
    %v620 = vxor.u32 %v606, 2147483648
    %v621 = vxor.u32 %v611, 2147483648
    %v622 = vmul.f32 %v618, 1.442695
    %v623 = vpow.pop %v622
    %v624 = vmul.f32 %v619, 1.442695
    %v625 = vpow.pop %v624
    %v626 = vmul.f32 %v620, 1.442695
    %v627 = vpow.pop %v626
    %v628 = vmul.f32 %v621, 1.442695
    %v629 = vpow.pop %v628
    %v630 = vadd.f32 %v623, 1.0
    %v631 = vadd.f32 %v625, 1.0
    %v632 = vadd.f32 %v627, 1.0
    %v633 = vadd.f32 %v629, 1.0
    %v634 = vrcp.pop %v630
    %v635 = vmul.f32 1.0, %v634
    %v636 = vrcp.pop %v631
    %v637 = vmul.f32 1.0, %v636
    %v638 = vrcp.pop %v632
    %v639 = vmul.f32 1.0, %v638
    %v640 = vrcp.pop %v633
    %v641 = vmul.f32 1.0, %v640
    %646 = vrot.lane.b32.xlu0 %v635, 96
    %v647 = vpop.permute.xlu0 %646
    %648 = vrot.lane.b32.xlu0 %v637, 96
    %v649 = vpop.permute.xlu0 %648
    %650 = vrot.lane.b32.xlu0 %v639, 96
    %v651 = vpop.permute.xlu0 %650
    %652 = vrot.lane.b32.xlu0 %v641, 96
    %v653 = vpop.permute.xlu0 %652
    %v658 = vmul.f32 %v614, %v647
    %v659 = vmul.f32 %v615, %v649
    %v660 = vmul.f32 %v616, %v651
    %v661 = vmul.f32 %v617, %v653
    %v662 = vld [vmem:[#allocation2 + $0xd0] sm:$0xff]
    %v663 = vld [vmem:[#allocation2 + $0xd8] sm:$0xff]
    %v664 = vld [vmem:[#allocation2 + $0xe0] sm:$0xff]
    %v665 = vld [vmem:[#allocation2 + $0xe8] sm:$0xff]
    %v666 = vld [vmem:[#allocation2 + $0xf0] sm:$0x1]
    %v667 = vlaneseq
    %v668 = vshrl.u32 %v667, 7
    %v669 = vsub.s32 0, %v668
    %v670 = vrot.slane %v666, %v669
    %v672 = vsel %vm173, %v658, 0
    %v675 = vsel %vm173, %v659, 0
    %v678 = vsel %vm173, %v660, 0
    %v681 = vsel %vm173, %v661, 0
    %683 = vmatprep.subr.mxu0 0.0
    %684 = vmatpush1.msra.mxu0 %v662
    %685 = vmatprep.subr.mxu0 0.0
    %686 = vmatpush1.msra.mxu0 %v663
    %687 = vmatprep.subr.mxu0 0.0
    %688 = vmatpush1.msra.mxu0 %v664
    %689 = vmatprep.subr.mxu0 0.0
    %690 = vmatpush1.msra.mxu0 %v665
    %691 = vmatprep.subr.mxu0 0.0
    %692 = vmatpush1.msra.mxu0 0.0
    %693 = vmatprep.subr.mxu0 0.0
    %694 = vmatpush1.msra.mxu0 0.0
    %695 = vmatprep.subr.mxu0 0.0
    %696 = vmatpush1.msra.mxu0 0.0
    %697 = vmatprep.subr.mxu0 0.0
    %698 = vmatpush1.msra.mxu0 0.0
    %699 = vmatprep.subr.mxu0 0.0
    %700 = vmatpush1.msra.mxu0 0.0
    %701 = vmatprep.subr.mxu0 0.0
    %702 = vmatpush1.msra.mxu0 0.0
    %703 = vmatprep.subr.mxu0 0.0
    %704 = vmatpush1.msra.mxu0 0.0
    %705 = vmatprep.subr.mxu0 0.0
    %706 = vmatpush1.msra.mxu0 0.0
    %707 = vmatprep.subr.mxu0 0.0
    %708 = vmatpush1.msra.mxu0 0.0
    %709 = vmatprep.subr.mxu0 0.0
    %710 = vmatpush1.msra.mxu0 0.0
    %711 = vmatprep.subr.mxu0 0.0
    %712 = vmatpush1.msra.mxu0 0.0
    %713 = vmatprep.subr.mxu0 0.0
    %714 = vmatpush1.msra.mxu0 0.0
    %715 = vmatprep.subr.mxu0 0.0
    %716 = vmatpush1.msra.mxu0 0.0
    %717 = vmatprep.subr.mxu0 0.0
    %718 = vmatpush1.msra.mxu0 0.0
    %719 = vmatprep.subr.mxu0 0.0
    %720 = vmatpush1.msra.mxu0 0.0
    %721 = vmatprep.subr.mxu0 0.0
    %722 = vmatpush1.msra.mxu0 0.0
    %723 = vmatprep.subr.mxu0 0.0
    %724 = vmatpush1.msra.mxu0 0.0
    %725 = vmatprep.subr.mxu0 0.0
    %726 = vmatpush1.msra.mxu0 0.0
    %727 = vmatprep.subr.mxu0 0.0
    %728 = vmatpush1.msra.mxu0 0.0
    %729 = vmatprep.subr.mxu0 0.0
    %730 = vmatpush1.msra.mxu0 0.0
    %731 = vmatprep.subr.mxu0 0.0
    %732 = vmatpush1.msra.mxu0 0.0
    %733 = vmatprep.subr.mxu0 0.0
    %734 = vmatpush1.msra.mxu0 0.0
    %735 = vmatprep.subr.mxu0 0.0
    %736 = vmatpush1.msra.mxu0 0.0
    %737 = vmatprep.subr.mxu0 0.0
    %738 = vmatpush1.msra.mxu0 0.0
    %739 = vmatprep.subr.mxu0 0.0
    %740 = vmatpush1.msra.mxu0 0.0
    %741 = vmatprep.subr.mxu0 0.0
    %742 = vmatpush1.msra.mxu0 0.0
    %743 = vmatprep.subr.mxu0 0.0
    %744 = vmatpush1.msra.mxu0 0.0
    %745 = vmatprep.subr.mxu0 0.0
    %746 = vmatpush1.msra.mxu0 0.0
    %747 = vmatprep.mubr.f32.mxu0 0.0
    %748 = vmatmul.mubr.f32.gmra.mrb[0].mxu0 %v672
    %v749 = vpop.f32.mrb[0].mxu0
    %v750 = vadd.f32 %v670, %v749
    %v751 = vpop.f32.mrb[0].mxu0
    %752 = vmatprep.mubr.f32.mxu0 0.0
    %753 = vmatmul.mubr.f32.gmra.mrb[0].mxu0 %v675
    %v754 = vpop.f32.mrb[0].mxu0
    %v755 = vadd.f32 %v670, %v754
    %v756 = vpop.f32.mrb[0].mxu0
    %757 = vmatprep.mubr.f32.mxu0 0.0
    %758 = vmatmul.mubr.f32.gmra.mrb[0].mxu0 %v678
    %v759 = vpop.f32.mrb[0].mxu0
    %v760 = vadd.f32 %v670, %v759
    %v761 = vpop.f32.mrb[0].mxu0
    %762 = vmatprep.mubr.f32.mxu0 0.0
    %763 = vmatmul.mubr.f32.gmra.mrb[0].mxu0 %v681
    %v764 = vpop.f32.mrb[0].mxu0
    %v765 = vadd.f32 %v670, %v764
    %v766 = vpop.f32.mrb[0].mxu0
    %767 = vdwg.mxu0
    %v768 = vadd.f32 %v443, %v750
    %v769 = vadd.f32 %v444, %v755
    %v770 = vadd.f32 %v445, %v760
    %v771 = vadd.f32 %v446, %v765
    %776 = vrot.lane.b32.xlu0 %v750, 96
    %v777 = vpop.permute.xlu0 %776
    %778 = vrot.lane.b32.xlu0 %v755, 96
    %v779 = vpop.permute.xlu0 %778
    %780 = vrot.lane.b32.xlu0 %v760, 96
    %v781 = vpop.permute.xlu0 %780
    %782 = vrot.lane.b32.xlu0 %v765, 96
    %v783 = vpop.permute.xlu0 %782
    %v788 = vadd.f32 %v463, %v777
    %v789 = vadd.f32 %v464, %v779
    %v790 = vadd.f32 %v465, %v781
    %v791 = vadd.f32 %v466, %v783
    %vm792 = vcmp.ge.s32.totalorder %v136, 8
    %vm793 = vcmp.ge.s32.totalorder %v137, 8
    %vm794 = vcmp.ge.s32.totalorder %v138, 8
    %vm795 = vcmp.ge.s32.totalorder %v139, 8
    %v796 = vsel %vm792, %v791, 0.0
    %v797 = vsel %vm793, %v788, 0.0
    %v798 = vsel %vm794, %v789, 0.0
    %v799 = vsel %vm795, %v790, 0.0
    %804 = vrot.lane.b32.xlu0 %v796, 32
    %v805 = vpop.permute.xlu0 %804
    %806 = vrot.lane.b32.xlu0 %v797, 32
    %v807 = vpop.permute.xlu0 %806
    %808 = vrot.lane.b32.xlu0 %v798, 32
    %v809 = vpop.permute.xlu0 %808
    %810 = vrot.lane.b32.xlu0 %v799, 32
    %v811 = vpop.permute.xlu0 %810
    %v816 = vsel %vm173, %v788, %v805
    %v817 = vsel %vm173, %v789, %v807
    %v818 = vsel %vm173, %v790, %v809
    %v819 = vsel %vm173, %v791, %v811
    %v820 = vld [vmem:[#allocation2 + $0xf8] sm:$0xff]
    %v821 = vld [vmem:[#allocation2 + $0x100] sm:$0xff]
    %v822 = vld [vmem:[#allocation2 + $0x108] sm:$0xff]
    %v823 = vld [vmem:[#allocation2 + $0x110] sm:$0xff]
    %v824 = vld [vmem:[#allocation2 + $0x118] sm:$0xff]
    %v825 = vld [vmem:[#allocation2 + $0x120] sm:$0xff]
    %v826 = vld [vmem:[#allocation2 + $0x128] sm:$0xff]
    %v827 = vld [vmem:[#allocation2 + $0x130] sm:$0xff]
    %v828 = vld [vmem:[#allocation2 + $0x138] sm:$0x1]
    %v829 = vlaneseq
    %v830 = vshrl.u32 %v829, 7
    %v831 = vsub.s32 0, %v830
    %v832 = vrot.slane %v828, %v831
    %v834 = vsel %vm191, %v816, 0
    %v837 = vsel %vm191, %v817, 0
    %v840 = vsel %vm191, %v818, 0
    %v843 = vsel %vm191, %v819, 0
    %845 = vmatprep.subr.mxu0 0.0
    %846 = vmatpush1.msra.mxu0 %v820
    %847 = vmatprep.subr.mxu0 0.0
    %848 = vmatpush1.msra.mxu0 %v821
    %849 = vmatprep.subr.mxu0 0.0
    %850 = vmatpush1.msra.mxu0 %v822
    %851 = vmatprep.subr.mxu0 0.0
    %852 = vmatpush1.msra.mxu0 %v823
    %853 = vmatprep.subr.mxu0 0.0
    %854 = vmatpush1.msra.mxu0 %v824
    %855 = vmatprep.subr.mxu0 0.0
    %856 = vmatpush1.msra.mxu0 %v825
    %857 = vmatprep.subr.mxu0 0.0
    %858 = vmatpush1.msra.mxu0 %v826
    %859 = vmatprep.subr.mxu0 0.0
    %860 = vmatpush1.msra.mxu0 %v827
    %861 = vmatprep.subr.mxu0 0.0
    %862 = vmatpush1.msra.mxu0 0.0
    %863 = vmatprep.subr.mxu0 0.0
    %864 = vmatpush1.msra.mxu0 0.0
    %865 = vmatprep.subr.mxu0 0.0
    %866 = vmatpush1.msra.mxu0 0.0
    %867 = vmatprep.subr.mxu0 0.0
    %868 = vmatpush1.msra.mxu0 0.0
    %869 = vmatprep.subr.mxu0 0.0
    %870 = vmatpush1.msra.mxu0 0.0
    %871 = vmatprep.subr.mxu0 0.0
    %872 = vmatpush1.msra.mxu0 0.0
    %873 = vmatprep.subr.mxu0 0.0
    %874 = vmatpush1.msra.mxu0 0.0
    %875 = vmatprep.subr.mxu0 0.0
    %876 = vmatpush1.msra.mxu0 0.0
    %877 = vmatprep.subr.mxu0 0.0
    %878 = vmatpush1.msra.mxu0 0.0
    %879 = vmatprep.subr.mxu0 0.0
    %880 = vmatpush1.msra.mxu0 0.0
    %881 = vmatprep.subr.mxu0 0.0
    %882 = vmatpush1.msra.mxu0 0.0
    %883 = vmatprep.subr.mxu0 0.0
    %884 = vmatpush1.msra.mxu0 0.0
    %885 = vmatprep.subr.mxu0 0.0
    %886 = vmatpush1.msra.mxu0 0.0
    %887 = vmatprep.subr.mxu0 0.0
    %888 = vmatpush1.msra.mxu0 0.0
    %889 = vmatprep.subr.mxu0 0.0
    %890 = vmatpush1.msra.mxu0 0.0
    %891 = vmatprep.subr.mxu0 0.0
    %892 = vmatpush1.msra.mxu0 0.0
    %893 = vmatprep.subr.mxu0 0.0
    %894 = vmatpush1.msra.mxu0 0.0
    %895 = vmatprep.subr.mxu0 0.0
    %896 = vmatpush1.msra.mxu0 0.0
    %897 = vmatprep.subr.mxu0 0.0
    %898 = vmatpush1.msra.mxu0 0.0
    %899 = vmatprep.subr.mxu0 0.0
    %900 = vmatpush1.msra.mxu0 0.0
    %901 = vmatprep.subr.mxu0 0.0
    %902 = vmatpush1.msra.mxu0 0.0
    %903 = vmatprep.subr.mxu0 0.0
    %904 = vmatpush1.msra.mxu0 0.0
    %905 = vmatprep.subr.mxu0 0.0
    %906 = vmatpush1.msra.mxu0 0.0
    %907 = vmatprep.subr.mxu0 0.0
    %908 = vmatpush1.msra.mxu0 0.0
    %909 = vmatprep.mubr.f32.mxu0 0.0
    %910 = vmatmul.mubr.f32.gmra.mrb[0].mxu0 %v834
    %v911 = vpop.f32.mrb[0].mxu0
    %v912 = vadd.f32 %v832, %v911
    %v913 = vpop.f32.mrb[0].mxu0
    %914 = vmatprep.mubr.f32.mxu0 0.0
    %915 = vmatmul.mubr.f32.gmra.mrb[0].mxu0 %v837
    %v916 = vpop.f32.mrb[0].mxu0
    %v917 = vadd.f32 %v832, %v916
    %v918 = vpop.f32.mrb[0].mxu0
    %919 = vmatprep.mubr.f32.mxu0 0.0
    %920 = vmatmul.mubr.f32.gmra.mrb[0].mxu0 %v840
    %v921 = vpop.f32.mrb[0].mxu0
    %v922 = vadd.f32 %v832, %v921
    %v923 = vpop.f32.mrb[0].mxu0
    %924 = vmatprep.mubr.f32.mxu0 0.0
    %925 = vmatmul.mubr.f32.gmra.mrb[0].mxu0 %v843
    %v926 = vpop.f32.mrb[0].mxu0
    %v927 = vadd.f32 %v832, %v926
    %v928 = vpop.f32.mrb[0].mxu0
    %929 = vdwg.mxu0
    %v930 = vtanh.pop %v912
    %v931 = vtanh.pop %v917
    %v932 = vtanh.pop %v922
    %v933 = vtanh.pop %v927
    %v934 = vxor.u32 %v912, 2147483648
    %v935 = vxor.u32 %v917, 2147483648
    %v936 = vxor.u32 %v922, 2147483648
    %v937 = vxor.u32 %v927, 2147483648
    %v938 = vmul.f32 %v934, 1.442695
    %v939 = vpow.pop %v938
    %v940 = vmul.f32 %v935, 1.442695
    %v941 = vpow.pop %v940
    %v942 = vmul.f32 %v936, 1.442695
    %v943 = vpow.pop %v942
    %v944 = vmul.f32 %v937, 1.442695
    %v945 = vpow.pop %v944
    %v946 = vadd.f32 %v939, 1.0
    %v947 = vadd.f32 %v941, 1.0
    %v948 = vadd.f32 %v943, 1.0
    %v949 = vadd.f32 %v945, 1.0
    %v950 = vrcp.pop %v946
    %v951 = vmul.f32 1.0, %v950
    %v952 = vrcp.pop %v947
    %v953 = vmul.f32 1.0, %v952
    %v954 = vrcp.pop %v948
    %v955 = vmul.f32 1.0, %v954
    %v956 = vrcp.pop %v949
    %v957 = vmul.f32 1.0, %v956
    %962 = vrot.lane.b32.xlu0 %v951, 96
    %v963 = vpop.permute.xlu0 %962
    %964 = vrot.lane.b32.xlu0 %v953, 96
    %v965 = vpop.permute.xlu0 %964
    %966 = vrot.lane.b32.xlu0 %v955, 96
    %v967 = vpop.permute.xlu0 %966
    %968 = vrot.lane.b32.xlu0 %v957, 96
    %v969 = vpop.permute.xlu0 %968
    %v974 = vmul.f32 %v930, %v963
    %v975 = vmul.f32 %v931, %v965
    %v976 = vmul.f32 %v932, %v967
    %v977 = vmul.f32 %v933, %v969
    %v978 = vld [vmem:[#allocation2 + $0x140] sm:$0xff]
    %v979 = vld [vmem:[#allocation2 + $0x148] sm:$0xff]
    %v980 = vld [vmem:[#allocation2 + $0x150] sm:$0xff]
    %v981 = vld [vmem:[#allocation2 + $0x158] sm:$0xff]
    %v982 = vld [vmem:[#allocation2 + $0x160] sm:$0x1]
    %v983 = vlaneseq
    %v984 = vshrl.u32 %v983, 7
    %v985 = vsub.s32 0, %v984
    %v986 = vrot.slane %v982, %v985
    %v988 = vsel %vm173, %v974, 0
    %v991 = vsel %vm173, %v975, 0
    %v994 = vsel %vm173, %v976, 0
    %v997 = vsel %vm173, %v977, 0
    %999 = vmatprep.subr.mxu0 0.0
    %1000 = vmatpush1.msra.mxu0 %v978
    %1001 = vmatprep.subr.mxu0 0.0
    %1002 = vmatpush1.msra.mxu0 %v979
    %1003 = vmatprep.subr.mxu0 0.0
    %1004 = vmatpush1.msra.mxu0 %v980
    %1005 = vmatprep.subr.mxu0 0.0
    %1006 = vmatpush1.msra.mxu0 %v981
    %1007 = vmatprep.subr.mxu0 0.0
    %1008 = vmatpush1.msra.mxu0 0.0
    %1009 = vmatprep.subr.mxu0 0.0
    %1010 = vmatpush1.msra.mxu0 0.0
    %1011 = vmatprep.subr.mxu0 0.0
    %1012 = vmatpush1.msra.mxu0 0.0
    %1013 = vmatprep.subr.mxu0 0.0
    %1014 = vmatpush1.msra.mxu0 0.0
    %1015 = vmatprep.subr.mxu0 0.0
    %1016 = vmatpush1.msra.mxu0 0.0
    %1017 = vmatprep.subr.mxu0 0.0
    %1018 = vmatpush1.msra.mxu0 0.0
    %1019 = vmatprep.subr.mxu0 0.0
    %1020 = vmatpush1.msra.mxu0 0.0
    %1021 = vmatprep.subr.mxu0 0.0
    %1022 = vmatpush1.msra.mxu0 0.0
    %1023 = vmatprep.subr.mxu0 0.0
    %1024 = vmatpush1.msra.mxu0 0.0
    %1025 = vmatprep.subr.mxu0 0.0
    %1026 = vmatpush1.msra.mxu0 0.0
    %1027 = vmatprep.subr.mxu0 0.0
    %1028 = vmatpush1.msra.mxu0 0.0
    %1029 = vmatprep.subr.mxu0 0.0
    %1030 = vmatpush1.msra.mxu0 0.0
    %1031 = vmatprep.subr.mxu0 0.0
    %1032 = vmatpush1.msra.mxu0 0.0
    %1033 = vmatprep.subr.mxu0 0.0
    %1034 = vmatpush1.msra.mxu0 0.0
    %1035 = vmatprep.subr.mxu0 0.0
    %1036 = vmatpush1.msra.mxu0 0.0
    %1037 = vmatprep.subr.mxu0 0.0
    %1038 = vmatpush1.msra.mxu0 0.0
    %1039 = vmatprep.subr.mxu0 0.0
    %1040 = vmatpush1.msra.mxu0 0.0
    %1041 = vmatprep.subr.mxu0 0.0
    %1042 = vmatpush1.msra.mxu0 0.0
    %1043 = vmatprep.subr.mxu0 0.0
    %1044 = vmatpush1.msra.mxu0 0.0
    %1045 = vmatprep.subr.mxu0 0.0
    %1046 = vmatpush1.msra.mxu0 0.0
    %1047 = vmatprep.subr.mxu0 0.0
    %1048 = vmatpush1.msra.mxu0 0.0
    %1049 = vmatprep.subr.mxu0 0.0
    %1050 = vmatpush1.msra.mxu0 0.0
    %1051 = vmatprep.subr.mxu0 0.0
    %1052 = vmatpush1.msra.mxu0 0.0
    %1053 = vmatprep.subr.mxu0 0.0
    %1054 = vmatpush1.msra.mxu0 0.0
    %1055 = vmatprep.subr.mxu0 0.0
    %1056 = vmatpush1.msra.mxu0 0.0
    %1057 = vmatprep.subr.mxu0 0.0
    %1058 = vmatpush1.msra.mxu0 0.0
    %1059 = vmatprep.subr.mxu0 0.0
    %1060 = vmatpush1.msra.mxu0 0.0
    %1061 = vmatprep.subr.mxu0 0.0
    %1062 = vmatpush1.msra.mxu0 0.0
    %1063 = vmatprep.mubr.f32.mxu0 0.0
    %1064 = vmatmul.mubr.f32.gmra.mrb[0].mxu0 %v988
    %v1065 = vpop.f32.mrb[0].mxu0
    %v1066 = vadd.f32 %v986, %v1065
    %v1067 = vpop.f32.mrb[0].mxu0
    %1068 = vmatprep.mubr.f32.mxu0 0.0
    %1069 = vmatmul.mubr.f32.gmra.mrb[0].mxu0 %v991
    %v1070 = vpop.f32.mrb[0].mxu0
    %v1071 = vadd.f32 %v986, %v1070
    %v1072 = vpop.f32.mrb[0].mxu0
    %1073 = vmatprep.mubr.f32.mxu0 0.0
    %1074 = vmatmul.mubr.f32.gmra.mrb[0].mxu0 %v994
    %v1075 = vpop.f32.mrb[0].mxu0
    %v1076 = vadd.f32 %v986, %v1075
    %v1077 = vpop.f32.mrb[0].mxu0
    %1078 = vmatprep.mubr.f32.mxu0 0.0
    %1079 = vmatmul.mubr.f32.gmra.mrb[0].mxu0 %v997
    %v1080 = vpop.f32.mrb[0].mxu0
    %v1081 = vadd.f32 %v986, %v1080
    %v1082 = vpop.f32.mrb[0].mxu0
    %1083 = vdwg.mxu0
    %v1084 = vadd.f32 %v768, %v1066
    %v1085 = vadd.f32 %v769, %v1071
    %v1086 = vadd.f32 %v770, %v1076
    %v1087 = vadd.f32 %v771, %v1081
    %v1088 = vmax.f32 %v1084, 0.0
    %v1089 = vmax.f32 %v1085, 0.0
    %v1090 = vmax.f32 %v1086, 0.0
    %v1091 = vmax.f32 %v1087, 0.0
    %v1092 = vld [vmem:[#allocation2 + $0x168] sm:$0xff]
    %v1093 = vld [vmem:[#allocation2 + $0x170] sm:$0xff]
    %v1094 = vld [vmem:[#allocation2 + $0x178] sm:$0xff]
    %v1095 = vld [vmem:[#allocation2 + $0x180] sm:$0xff]
    %v1096 = vld [vmem:[#allocation2 + $0x188] sm:$0x1]
    %v1097 = vlaneseq
    %v1098 = vshrl.u32 %v1097, 7
    %v1099 = vsub.s32 0, %v1098
    %v1100 = vrot.slane %v1096, %v1099
    %v1102 = vsel %vm173, %v1088, 0
    %v1105 = vsel %vm173, %v1089, 0
    %v1108 = vsel %vm173, %v1090, 0
    %v1111 = vsel %vm173, %v1091, 0
    %1113 = vmatprep.subr.mxu0 0.0
    %1114 = vmatpush1.msra.mxu0 %v1092
    %1115 = vmatprep.subr.mxu0 0.0
    %1116 = vmatpush1.msra.mxu0 %v1093
    %1117 = vmatprep.subr.mxu0 0.0
    %1118 = vmatpush1.msra.mxu0 %v1094
    %1119 = vmatprep.subr.mxu0 0.0
    %1120 = vmatpush1.msra.mxu0 %v1095
    %1121 = vmatprep.subr.mxu0 0.0
    %1122 = vmatpush1.msra.mxu0 0.0
    %1123 = vmatprep.subr.mxu0 0.0
    %1124 = vmatpush1.msra.mxu0 0.0
    %1125 = vmatprep.subr.mxu0 0.0
    %1126 = vmatpush1.msra.mxu0 0.0
    %1127 = vmatprep.subr.mxu0 0.0
    %1128 = vmatpush1.msra.mxu0 0.0
    %1129 = vmatprep.subr.mxu0 0.0
    %1130 = vmatpush1.msra.mxu0 0.0
    %1131 = vmatprep.subr.mxu0 0.0
    %1132 = vmatpush1.msra.mxu0 0.0
    %1133 = vmatprep.subr.mxu0 0.0
    %1134 = vmatpush1.msra.mxu0 0.0
    %1135 = vmatprep.subr.mxu0 0.0
    %1136 = vmatpush1.msra.mxu0 0.0
    %1137 = vmatprep.subr.mxu0 0.0
    %1138 = vmatpush1.msra.mxu0 0.0
    %1139 = vmatprep.subr.mxu0 0.0
    %1140 = vmatpush1.msra.mxu0 0.0
    %1141 = vmatprep.subr.mxu0 0.0
    %1142 = vmatpush1.msra.mxu0 0.0
    %1143 = vmatprep.subr.mxu0 0.0
    %1144 = vmatpush1.msra.mxu0 0.0
    %1145 = vmatprep.subr.mxu0 0.0
    %1146 = vmatpush1.msra.mxu0 0.0
    %1147 = vmatprep.subr.mxu0 0.0
    %1148 = vmatpush1.msra.mxu0 0.0
    %1149 = vmatprep.subr.mxu0 0.0
    %1150 = vmatpush1.msra.mxu0 0.0
    %1151 = vmatprep.subr.mxu0 0.0
    %1152 = vmatpush1.msra.mxu0 0.0
    %1153 = vmatprep.subr.mxu0 0.0
    %1154 = vmatpush1.msra.mxu0 0.0
    %1155 = vmatprep.subr.mxu0 0.0
    %1156 = vmatpush1.msra.mxu0 0.0
    %1157 = vmatprep.subr.mxu0 0.0
    %1158 = vmatpush1.msra.mxu0 0.0
    %1159 = vmatprep.subr.mxu0 0.0
    %1160 = vmatpush1.msra.mxu0 0.0
    %1161 = vmatprep.subr.mxu0 0.0
    %1162 = vmatpush1.msra.mxu0 0.0
    %1163 = vmatprep.subr.mxu0 0.0
    %1164 = vmatpush1.msra.mxu0 0.0
    %1165 = vmatprep.subr.mxu0 0.0
    %1166 = vmatpush1.msra.mxu0 0.0
    %1167 = vmatprep.subr.mxu0 0.0
    %1168 = vmatpush1.msra.mxu0 0.0
    %1169 = vmatprep.subr.mxu0 0.0
    %1170 = vmatpush1.msra.mxu0 0.0
    %1171 = vmatprep.subr.mxu0 0.0
    %1172 = vmatpush1.msra.mxu0 0.0
    %1173 = vmatprep.subr.mxu0 0.0
    %1174 = vmatpush1.msra.mxu0 0.0
    %1175 = vmatprep.subr.mxu0 0.0
    %1176 = vmatpush1.msra.mxu0 0.0
    %1177 = vmatprep.mubr.f32.mxu0 0.0
    %1178 = vmatmul.mubr.f32.gmra.mrb[0].mxu0 %v1102
    %v1179 = vpop.f32.mrb[0].mxu0
    %v1180 = vadd.f32 %v1100, %v1179
    %v1181 = vpop.f32.mrb[0].mxu0
    %1182 = vmatprep.mubr.f32.mxu0 0.0
    %1183 = vmatmul.mubr.f32.gmra.mrb[0].mxu0 %v1105
    %v1184 = vpop.f32.mrb[0].mxu0
    %v1185 = vadd.f32 %v1100, %v1184
    %v1186 = vpop.f32.mrb[0].mxu0
    %1187 = vmatprep.mubr.f32.mxu0 0.0
    %1188 = vmatmul.mubr.f32.gmra.mrb[0].mxu0 %v1108
    %v1189 = vpop.f32.mrb[0].mxu0
    %v1190 = vadd.f32 %v1100, %v1189
    %v1191 = vpop.f32.mrb[0].mxu0
    %1192 = vmatprep.mubr.f32.mxu0 0.0
    %1193 = vmatmul.mubr.f32.gmra.mrb[0].mxu0 %v1111
    %v1194 = vpop.f32.mrb[0].mxu0
    %v1195 = vadd.f32 %v1100, %v1194
    %v1196 = vpop.f32.mrb[0].mxu0
    %1197 = vdwg.mxu0
    %v1198 = vmax.f32 %v1180, 0.0
    %v1199 = vmax.f32 %v1185, 0.0
    %v1200 = vmax.f32 %v1190, 0.0
    %v1201 = vmax.f32 %v1195, 0.0
    %v1202 = vld [vmem:[#allocation2 + $0x190] sm:$0xff]
    %v1203 = vld [vmem:[#allocation2 + $0x198] sm:$0xff]
    %v1204 = vld [vmem:[#allocation2 + $0x1a0] sm:$0xff]
    %v1205 = vld [vmem:[#allocation2 + $0x1a8] sm:$0xff]
    %v1206 = vld [vmem:[#allocation2 + $0x1b0] sm:$0x1]
    %v1207 = vlaneseq
    %v1208 = vshrl.u32 %v1207, 7
    %v1209 = vsub.s32 0, %v1208
    %v1210 = vrot.slane %v1206, %v1209
    %v1212 = vsel %vm173, %v1198, 0
    %v1215 = vsel %vm173, %v1199, 0
    %v1218 = vsel %vm173, %v1200, 0
    %v1221 = vsel %vm173, %v1201, 0
    %1223 = vmatprep.subr.mxu0 0.0
    %1224 = vmatpush1.msra.mxu0 %v1202
    %1225 = vmatprep.subr.mxu0 0.0
    %1226 = vmatpush1.msra.mxu0 %v1203
    %1227 = vmatprep.subr.mxu0 0.0
    %1228 = vmatpush1.msra.mxu0 %v1204
    %1229 = vmatprep.subr.mxu0 0.0
    %1230 = vmatpush1.msra.mxu0 %v1205
    %1231 = vmatprep.subr.mxu0 0.0
    %1232 = vmatpush1.msra.mxu0 0.0
    %1233 = vmatprep.subr.mxu0 0.0
    %1234 = vmatpush1.msra.mxu0 0.0
    %1235 = vmatprep.subr.mxu0 0.0
    %1236 = vmatpush1.msra.mxu0 0.0
    %1237 = vmatprep.subr.mxu0 0.0
    %1238 = vmatpush1.msra.mxu0 0.0
    %1239 = vmatprep.subr.mxu0 0.0
    %1240 = vmatpush1.msra.mxu0 0.0
    %1241 = vmatprep.subr.mxu0 0.0
    %1242 = vmatpush1.msra.mxu0 0.0
    %1243 = vmatprep.subr.mxu0 0.0
    %1244 = vmatpush1.msra.mxu0 0.0
    %1245 = vmatprep.subr.mxu0 0.0
    %1246 = vmatpush1.msra.mxu0 0.0
    %1247 = vmatprep.subr.mxu0 0.0
    %1248 = vmatpush1.msra.mxu0 0.0
    %1249 = vmatprep.subr.mxu0 0.0
    %1250 = vmatpush1.msra.mxu0 0.0
    %1251 = vmatprep.subr.mxu0 0.0
    %1252 = vmatpush1.msra.mxu0 0.0
    %1253 = vmatprep.subr.mxu0 0.0
    %1254 = vmatpush1.msra.mxu0 0.0
    %1255 = vmatprep.subr.mxu0 0.0
    %1256 = vmatpush1.msra.mxu0 0.0
    %1257 = vmatprep.subr.mxu0 0.0
    %1258 = vmatpush1.msra.mxu0 0.0
    %1259 = vmatprep.subr.mxu0 0.0
    %1260 = vmatpush1.msra.mxu0 0.0
    %1261 = vmatprep.subr.mxu0 0.0
    %1262 = vmatpush1.msra.mxu0 0.0
    %1263 = vmatprep.subr.mxu0 0.0
    %1264 = vmatpush1.msra.mxu0 0.0
    %1265 = vmatprep.subr.mxu0 0.0
    %1266 = vmatpush1.msra.mxu0 0.0
    %1267 = vmatprep.subr.mxu0 0.0
    %1268 = vmatpush1.msra.mxu0 0.0
    %1269 = vmatprep.subr.mxu0 0.0
    %1270 = vmatpush1.msra.mxu0 0.0
    %1271 = vmatprep.subr.mxu0 0.0
    %1272 = vmatpush1.msra.mxu0 0.0
    %1273 = vmatprep.subr.mxu0 0.0
    %1274 = vmatpush1.msra.mxu0 0.0
    %1275 = vmatprep.subr.mxu0 0.0
    %1276 = vmatpush1.msra.mxu0 0.0
    %1277 = vmatprep.subr.mxu0 0.0
    %1278 = vmatpush1.msra.mxu0 0.0
    %1279 = vmatprep.subr.mxu0 0.0
    %1280 = vmatpush1.msra.mxu0 0.0
    %1281 = vmatprep.subr.mxu0 0.0
    %1282 = vmatpush1.msra.mxu0 0.0
    %1283 = vmatprep.subr.mxu0 0.0
    %1284 = vmatpush1.msra.mxu0 0.0
    %1285 = vmatprep.subr.mxu0 0.0
    %1286 = vmatpush1.msra.mxu0 0.0
    %1287 = vmatprep.mubr.f32.mxu0 0.0
    %1288 = vmatmul.mubr.f32.gmra.mrb[0].mxu0 %v1212
    %v1289 = vpop.f32.mrb[0].mxu0
    %v1290 = vadd.f32 %v1210, %v1289
    %v1291 = vpop.f32.mrb[0].mxu0
    %1292 = vmatprep.mubr.f32.mxu0 0.0
    %1293 = vmatmul.mubr.f32.gmra.mrb[0].mxu0 %v1215
    %v1294 = vpop.f32.mrb[0].mxu0
    %v1295 = vadd.f32 %v1210, %v1294
    %v1296 = vpop.f32.mrb[0].mxu0
    %1297 = vmatprep.mubr.f32.mxu0 0.0
    %1298 = vmatmul.mubr.f32.gmra.mrb[0].mxu0 %v1218
    %v1299 = vpop.f32.mrb[0].mxu0
    %v1300 = vadd.f32 %v1210, %v1299
    %v1301 = vpop.f32.mrb[0].mxu0
    %1302 = vmatprep.mubr.f32.mxu0 0.0
    %1303 = vmatmul.mubr.f32.gmra.mrb[0].mxu0 %v1221
    %v1304 = vpop.f32.mrb[0].mxu0
    %v1305 = vadd.f32 %v1210, %v1304
    %v1306 = vpop.f32.mrb[0].mxu0
    %1307 = vdwg.mxu0
    %1308 = vst [vmem:[#allocation5] sm:$0xff] %v1290
    %1309 = vst [vmem:[#allocation5 + $0x8] sm:$0xff] %v1295
    %1310 = vst [vmem:[#allocation5 + $0x10] sm:$0xff] %v1300
    %1311 = vst [vmem:[#allocation5 + $0x18] sm:$0xff] %v1305
    // Predicated region
    $region14: #{tpu_custom_call.1} parent=1 // pred_check
      _
    $region15: #{tpu_custom_call.1} parent=1 // pred_check_branch
      %1313 = sbr.rel (0) target = $region17
    $region16: #{tpu_custom_call.1} parent=1 // pred_region
      %s1315 = ssub.s32 512, 512
      %1316 = vsyncadd [#allocation4], %s1315
      %s1317 = sshll.u32 [#allocation5], 4
      %s1318 = int_to_ptr.vmem [resolvable:$true] %s1317
      %1323 = dma.vmem_to_hbm [thread:$0]  %s1318, 512, %s2, [#allocation4], 128, 128, 8
    $region17: #{tpu_custom_call.1} parent=1 // pred_fallthru
      _
    // Predicated region
    $region18: #{tpu_custom_call.1} parent=1 // pred_check
      _
    $region19: #{tpu_custom_call.1} parent=1 // pred_check_branch
      %1325 = sbr.rel (0) target = $region21
    $region20: #{tpu_custom_call.1} parent=1 // pred_region
      %1326 = dma.done [#allocation4], 512
    $region21: #{tpu_custom_call.1} parent=1 // pred_fallthru
      _
    %1327 = vsyncpa [#allocation3], 1
    %1328 = vsyncpa [#allocation4], 1

</llo_original>
